<compile_context>
chip_gen: v7x
topology: tpu7x:2x2x1
jax: 0.10.0
libtpu: 0.0.40
codegen_flags: <defaults>
</compile_context>

<pallas_src>
import functools

import jax
import jax.numpy as jnp
from jax.experimental import pallas as pl
from jax.experimental.pallas import tpu as pltpu

CLASSES = 120          # fixed by the PyTorch module
CLASSES_PAD = 128      # pad 120 -> 128 for lane-dense output stores (sliced back in wrapper)
IN_FEATURES = 256      # small stand-in for EfficientNet-B0's 1280 classifier in_features
STEM_CH = 32           # EfficientNet-B0 stem output channels
K_PATCH = 3 * 3 * 3    # im2col contraction (3x3 kernel, 3 input channels)
K_PAD = 32             # pad 27 -> 32 so the MXU contraction is tidy
DROP_P = 0.5


# ---------------------------------------------------------------------------
# Kernel 1: fused  stem GEMM(+SiLU) -> conv_head GEMM(+SiLU) -> global average pool
# Grid: (batch, spatial_tiles).  Pooled accumulator lives in the VMEM-resident output block.
# ---------------------------------------------------------------------------
def _backbone_pool_kernel(patches_ref, w_stem_ref, b_stem_ref, w_head_ref, b_head_ref,
                          pooled_ref, *, inv_hw):
    b = pl.program_id(0)
    t = pl.program_id(1)
    nb = pl.num_programs(0)
    nt = pl.num_programs(1)

    @pl.when((b == 0) & (t == 0))
    def _init():
        pooled_ref[...] = jnp.zeros_like(pooled_ref)

    # Stem conv as GEMM over im2col patches (bf16 operands, f32 accumulation) + SiLU in f32.
    stem = jnp.dot(patches_ref[...], w_stem_ref[...], preferred_element_type=jnp.float32)
    stem = stem + b_stem_ref[...]                       # folded-BN bias, f32
    stem = stem * jax.nn.sigmoid(stem)                  # SiLU

    # TODO(synk): frozen pretrained MBConv block stack of EfficientNet-B0 omitted.

    # conv_head 1x1 conv (== per-pixel GEMM) + SiLU; stays in VMEM/vregs, never hits HBM.
    feat = jnp.dot(stem.astype(jnp.bfloat16), w_head_ref[...],
                   preferred_element_type=jnp.float32)
    feat = feat + b_head_ref[...]
    feat = feat * jax.nn.sigmoid(feat)                  # SiLU, (tile_m, IN_FEATURES) f32

    # Accumulate spatial sum for this batch row into the resident pooled accumulator.
    psum = jnp.sum(feat, axis=0, keepdims=True)         # (1, IN_FEATURES)
    pooled_ref[pl.ds(b, 1), :] = pooled_ref[pl.ds(b, 1), :] + psum

    @pl.when((b == nb - 1) & (t == nt - 1))
    def _finalize():
        pooled_ref[...] = pooled_ref[...] * inv_hw      # mean over H*W


def backbone_pool(patches, w_stem, b_stem, w_head, b_head, *, hw, tile_m, b_pad):
    B = patches.shape[0]
    n_tiles = hw // tile_m
    return pl.pallas_call(
        functools.partial(_backbone_pool_kernel, inv_hw=1.0 / float(hw)),
        out_shape=jax.ShapeDtypeStruct((b_pad, IN_FEATURES), jnp.float32),
        grid_spec=pltpu.PrefetchScalarGridSpec(
            num_scalar_prefetch=0,
            grid=(B, n_tiles),
            in_specs=[
                pl.BlockSpec((None, tile_m, K_PAD), lambda b, t: (b, t, 0)),   # patch tile
                pl.BlockSpec((K_PAD, STEM_CH), lambda b, t: (0, 0)),           # stem weight
                pl.BlockSpec((1, STEM_CH), lambda b, t: (0, 0)),               # stem bias
                pl.BlockSpec((STEM_CH, IN_FEATURES), lambda b, t: (0, 0)),     # conv_head weight
                pl.BlockSpec((1, IN_FEATURES), lambda b, t: (0, 0)),           # conv_head bias
            ],
            out_specs=pl.BlockSpec((b_pad, IN_FEATURES), lambda b, t: (0, 0)),
        ),
        # Pooled output block is resident across the whole grid (accumulator), so both axes
        # must be "arbitrary"; per-batch output tiling would be needed to mark b "parallel".
        compiler_params=pltpu.CompilerParams(
            dimension_semantics=("arbitrary", "arbitrary")),
    )(patches, w_stem, b_stem.reshape(1, STEM_CH), w_head, b_head.reshape(1, IN_FEATURES))


# ---------------------------------------------------------------------------
# Kernel 2: fused classifier head  Linear -> ReLU -> Dropout(0.5) -> Linear
# ---------------------------------------------------------------------------
def _head_kernel(x_ref, w1_ref, b1_ref, u_ref, w2_ref, b2_ref, o_ref, *, training, drop_p):
    x = x_ref[...].astype(jnp.bfloat16)
    h = jnp.dot(x, w1_ref[...], preferred_element_type=jnp.float32) + b1_ref[...]
    h = jnp.maximum(h, 0.0)                                    # ReLU (f32)
    if training and drop_p > 0.0:                              # Dropout, train-mode semantics
        keep = u_ref[...] >= drop_p                            # P(keep) = 1 - p
        h = jnp.where(keep, h * (1.0 / (1.0 - drop_p)), 0.0)
    out = jnp.dot(h.astype(jnp.bfloat16), w2_ref[...], preferred_element_type=jnp.float32)
    o_ref[...] = out + b2_ref[...]


def classifier_head(pooled, w1, b1, w2_pad, b2_pad, dropout_u, *, training, drop_p=DROP_P):
    b_pad = pooled.shape[0]
    return pl.pallas_call(
        functools.partial(_head_kernel, training=training, drop_p=drop_p),
        out_shape=jax.ShapeDtypeStruct((b_pad, CLASSES_PAD), jnp.float32),
        in_specs=[pl.BlockSpec(memory_space=pltpu.MemorySpace.VMEM)] * 6,
        out_specs=pl.BlockSpec(memory_space=pltpu.MemorySpace.VMEM),
    )(pooled, w1, b1.reshape(1, IN_FEATURES), dropout_u, w2_pad, b2_pad.reshape(1, CLASSES_PAD))


# ---------------------------------------------------------------------------
# Plain-JAX glue
# ---------------------------------------------------------------------------
def im2col(x_nhwc, kh, kw, stride, pad):
    # TODO(synk): patch gather is still materialized in HBM by XLA; at real 224x224 inputs it
    # should be folded into the Pallas pipeline (shifted-strip DMA), minor at this toy size.
    B, H, W, C = x_nhwc.shape
    xp = jnp.pad(x_nhwc, ((0, 0), (pad, pad), (pad, pad), (0, 0)))
    Ho = (H + 2 * pad - kh) // stride + 1
    Wo = (W + 2 * pad - kw) // stride + 1
    cols = [xp[:, i:i + stride * Ho:stride, j:j + stride * Wo:stride, :]
            for i in range(kh) for j in range(kw)]
    patches = jnp.concatenate(cols, axis=-1)                  # (B, Ho, Wo, kh*kw*C)
    return patches.reshape(B, Ho * Wo, kh * kw * C), (Ho, Wo)


def _choose_tile(hw, max_tile=512):
    for cand in (max_tile, 256, 128, 64, 32, 16, 8):
        if cand <= hw and hw % cand == 0:
            return cand
    return hw


# ---------------------------------------------------------------------------
# Forward pass equivalent of LitModel.forward(x)
# ---------------------------------------------------------------------------
def lit_model_forward(params, x_nchw, *, training=True, dropout_seed=0):
    x = jnp.transpose(x_nchw, (0, 2, 3, 1)).astype(jnp.float32)   # NCHW -> NHWC
    B = x.shape[0]
    b_pad = max(8, ((B + 7) // 8) * 8)                            # sublane-dense batch rows

    # im2col for the stem conv; pad contraction 27 -> 32 and cast matmul operands to bf16.
    patches, (Ho, Wo) = im2col(x, 3, 3, 2, 1)
    hw = Ho * Wo
    patches = jnp.pad(patches, ((0, 0), (0, 0), (0, K_PAD - K_PATCH))).astype(jnp.bfloat16)
    w_stem = jnp.pad(params["w_stem"], ((0, K_PAD - K_PATCH), (0, 0))).astype(jnp.bfloat16)
    w_head = params["w_convhead"].astype(jnp.bfloat16)

    # Fused stem -> conv_head -> global-average-pool (one pallas_call, tiled over rows).
    tile_m = _choose_tile(hw)
    pooled = backbone_pool(patches, w_stem, params["b_stem"], w_head, params["b_convhead"],
                           hw=hw, tile_m=tile_m, b_pad=b_pad)     # (b_pad, IN_FEATURES) f32

    # Dropout uniforms generated with jax.random in the wrapper (portable); caller must vary
    # dropout_seed every training step for fresh masks.
    u = jax.random.uniform(jax.random.PRNGKey(dropout_seed), (b_pad, IN_FEATURES), jnp.float32)

    # Classifier head with classes padded 120 -> 128 for lane-dense stores.
    w1 = params["w1"].astype(jnp.bfloat16)
    w2p = jnp.pad(params["w2"], ((0, 0), (0, CLASSES_PAD - CLASSES))).astype(jnp.bfloat16)
    b2p = jnp.pad(params["b2"], (0, CLASSES_PAD - CLASSES))
    logits_pad = classifier_head(pooled, w1, params["b1"], w2p, b2p, u,
                                 training=training, drop_p=DROP_P)
    return logits_pad[:B, :CLASSES]                               # [B, CLASSES]


def init_params(key):
    ks = jax.random.split(key, 6)

    def nrm(k, shape, scale=0.05):
        return jax.random.normal(k, shape, jnp.float32) * scale

    return {
        # stem conv weight in im2col layout: (kh*kw*Cin, Cout); bias = folded BN beta (0).
        "w_stem": nrm(ks[0], (K_PATCH, STEM_CH)),
        "b_stem": jnp.zeros((STEM_CH,), jnp.float32),
        "w_convhead": nrm(ks[1], (STEM_CH, IN_FEATURES)),
        "b_convhead": jnp.zeros((IN_FEATURES,), jnp.float32),
        # classifier: Linear(F, F) then Linear(F, CLASSES), stored as (in, out).
        "w1": nrm(ks[2], (IN_FEATURES, IN_FEATURES)),
        "b1": nrm(ks[3], (IN_FEATURES,), 0.01),
        "w2": nrm(ks[4], (IN_FEATURES, CLASSES)),
        "b2": nrm(ks[5], (CLASSES,), 0.01),
    }


if __name__ == "__main__":
    key = jax.random.PRNGKey(0)
    k_x, k_p = jax.random.split(key)

    # Small image batch, PyTorch NCHW convention: [batch=2, channels=3, H=32, W=32]
    x = jax.random.normal(k_x, (2, 3, 32, 32), dtype=jnp.float32)
    params = init_params(k_p)

    logits = lit_model_forward(params, x, training=True, dropout_seed=0)
    logits = jax.block_until_ready(logits)

    assert logits.shape == (2, CLASSES), logits.shape
    assert bool(jnp.all(jnp.isfinite(logits)))
    print("KERNEL_OK")
</pallas_src>

<mosaic_0001>
module attributes {stable_mosaic.version = 11 : i64} {
  func.func @_backbone_pool_kernel(%arg0: i32, %arg1: i32, %arg2: memref<1x256x32xbf16, #tpu.memory_space<vmem>>, %arg3: memref<32x32xbf16, #tpu.memory_space<vmem>>, %arg4: memref<1x32xf32, #tpu.memory_space<vmem>>, %arg5: memref<32x256xbf16, #tpu.memory_space<vmem>>, %arg6: memref<1x256xf32, #tpu.memory_space<vmem>>, %arg7: memref<8x256xf32, #tpu.memory_space<vmem>>) attributes {dimension_semantics = [#tpu.dimension_semantics<arbitrary>, #tpu.dimension_semantics<arbitrary>], iteration_bounds = array<i64: 2, 1>, scalar_prefetch = 0 : i64, scratch_operands = 0 : i64, tpu.core_type = #tpu.core_type<tc>, window_params = [{transform_indices = @transform_0, window_bounds = array<i64: 1, 256, 32>}, {pipeline_mode = #tpu.pipeline_mode<synchronous>, transform_indices = @transform_1, window_bounds = array<i64: 32, 32>}, {pipeline_mode = #tpu.pipeline_mode<synchronous>, transform_indices = @transform_2, window_bounds = array<i64: 1, 32>}, {pipeline_mode = #tpu.pipeline_mode<synchronous>, transform_indices = @transform_3, window_bounds = array<i64: 32, 256>}, {pipeline_mode = #tpu.pipeline_mode<synchronous>, transform_indices = @transform_4, window_bounds = array<i64: 1, 256>}, {pipeline_mode = #tpu.pipeline_mode<synchronous>, transform_indices = @transform_5, window_bounds = array<i64: 8, 256>}]} {
    %c0_i32 = arith.constant 0 : i32
    %0 = arith.cmpi eq, %arg0, %c0_i32 : i32
    %c0_i32_0 = arith.constant 0 : i32
    %1 = arith.cmpi eq, %arg1, %c0_i32_0 : i32
    %2 = arith.andi %0, %1 : i1
    %3 = arith.extui %2 : i1 to i32
    %c0_i32_1 = arith.constant 0 : i32
    %4 = arith.cmpi ne, %3, %c0_i32_1 : i32
    scf.if %4 {
      %cst_20 = arith.constant 0.000000e+00 : f32
      %42 = vector.broadcast %cst_20 : f32 to vector<8x256xf32>
      %c0_21 = arith.constant 0 : index
      %c0_22 = arith.constant 0 : index
      %43 = vector.load %arg7[%c0_21, %c0_22] : memref<8x256xf32, #tpu.memory_space<vmem>>, vector<8x256xf32>
      tpu.vector_store %arg7[%c0_21, %c0_22], %42 {strides = array<i32>} : memref<8x256xf32, #tpu.memory_space<vmem>>, vector<8x256xf32>,
    } else {
    }
    %c0 = arith.constant 0 : index
    %c0_2 = arith.constant 0 : index
    %c0_3 = arith.constant 0 : index
    %5 = vector.load %arg2[%c0, %c0_2, %c0_3] : memref<1x256x32xbf16, #tpu.memory_space<vmem>>, vector<1x256x32xbf16>
    %6 = vector.shape_cast %5 : vector<1x256x32xbf16> to vector<256x32xbf16>
    %c0_4 = arith.constant 0 : index
    %c0_5 = arith.constant 0 : index
    %7 = vector.load %arg3[%c0_4, %c0_5] : memref<32x32xbf16, #tpu.memory_space<vmem>>, vector<32x32xbf16>
    %cst = arith.constant dense<0.000000e+00> : vector<256x32xf32>
    %8 = tpu.matmul %6, %7, %cst {dimension_numbers = #tpu.dot_dimension_numbers<[1], [0], [0], [1], [0, 0, 1, 1], [], []>} : vector<256x32xbf16>, vector<32x32xbf16>, vector<256x32xf32> -> vector<256x32xf32>
    %c0_6 = arith.constant 0 : index
    %c0_7 = arith.constant 0 : index
    %9 = vector.load %arg4[%c0_6, %c0_7] : memref<1x32xf32, #tpu.memory_space<vmem>>, vector<1x32xf32>
    %10 = vector.broadcast %9 : vector<1x32xf32> to vector<256x32xf32>
    %11 = arith.addf %8, %10 : vector<256x32xf32>
    %12 = arith.negf %11 : vector<256x32xf32>
    %13 = math.exp %12 : vector<256x32xf32>
    %cst_8 = arith.constant 1.000000e+00 : f32
    %14 = vector.broadcast %cst_8 : f32 to vector<256x32xf32>
    %15 = arith.addf %14, %13 : vector<256x32xf32>
    %16 = arith.divf %14, %15 : vector<256x32xf32>
    %17 = arith.mulf %11, %16 : vector<256x32xf32>
    %18 = arith.truncf %17 : vector<256x32xf32> to vector<256x32xbf16>
    %c0_9 = arith.constant 0 : index
    %c0_10 = arith.constant 0 : index
    %19 = vector.load %arg5[%c0_9, %c0_10] : memref<32x256xbf16, #tpu.memory_space<vmem>>, vector<32x256xbf16>
    %cst_11 = arith.constant dense<0.000000e+00> : vector<256x256xf32>
    %20 = tpu.matmul %18, %19, %cst_11 {dimension_numbers = #tpu.dot_dimension_numbers<[1], [0], [0], [1], [0, 0, 1, 1], [], []>} : vector<256x32xbf16>, vector<32x256xbf16>, vector<256x256xf32> -> vector<256x256xf32>
    %c0_12 = arith.constant 0 : index
    %c0_13 = arith.constant 0 : index
    %21 = vector.load %arg6[%c0_12, %c0_13] : memref<1x256xf32, #tpu.memory_space<vmem>>, vector<1x256xf32>
    %22 = vector.broadcast %21 : vector<1x256xf32> to vector<256x256xf32>
    %23 = arith.addf %20, %22 : vector<256x256xf32>
    %24 = arith.negf %23 : vector<256x256xf32>
    %25 = math.exp %24 : vector<256x256xf32>
    %cst_14 = arith.constant 1.000000e+00 : f32
    %26 = vector.broadcast %cst_14 : f32 to vector<256x256xf32>
    %27 = arith.addf %26, %25 : vector<256x256xf32>
    %28 = arith.divf %26, %27 : vector<256x256xf32>
    %29 = arith.mulf %23, %28 : vector<256x256xf32>
    %cst_15 = arith.constant dense<0.000000e+00> : vector<256xf32>
    %30 = vector.multi_reduction <add>, %29, %cst_15 [0] : vector<256x256xf32> to vector<256xf32>
    %31 = vector.shape_cast %30 : vector<256xf32> to vector<1x256xf32>
    %32 = arith.index_cast %arg0 : i32 to index
    %c0_16 = arith.constant 0 : index
    %33 = vector.load %arg7[%32, %c0_16] : memref<8x256xf32, #tpu.memory_space<vmem>>, vector<1x256xf32>
    %34 = arith.addf %33, %31 : vector<1x256xf32>
    %35 = arith.index_cast %arg0 : i32 to index
    %c0_17 = arith.constant 0 : index
    %36 = vector.load %arg7[%35, %c0_17] : memref<8x256xf32, #tpu.memory_space<vmem>>, vector<1x256xf32>
    tpu.vector_store %arg7[%35, %c0_17], %34 {strides = array<i32>} : memref<8x256xf32, #tpu.memory_space<vmem>>, vector<1x256xf32>,
    %c1_i32 = arith.constant 1 : i32
    %37 = arith.cmpi eq, %arg0, %c1_i32 : i32
    %c0_i32_18 = arith.constant 0 : i32
    %38 = arith.cmpi eq, %arg1, %c0_i32_18 : i32
    %39 = arith.andi %37, %38 : i1
    %40 = arith.extui %39 : i1 to i32
    %c0_i32_19 = arith.constant 0 : i32
    %41 = arith.cmpi ne, %40, %c0_i32_19 : i32
    scf.if %41 {
      %c0_20 = arith.constant 0 : index
      %c0_21 = arith.constant 0 : index
      %42 = vector.load %arg7[%c0_20, %c0_21] : memref<8x256xf32, #tpu.memory_space<vmem>>, vector<8x256xf32>
      %cst_22 = arith.constant 3.906250e-03 : f32
      %43 = vector.broadcast %cst_22 : f32 to vector<8x256xf32>
      %44 = arith.mulf %42, %43 : vector<8x256xf32>
      %c0_23 = arith.constant 0 : index
      %c0_24 = arith.constant 0 : index
      %45 = vector.load %arg7[%c0_23, %c0_24] : memref<8x256xf32, #tpu.memory_space<vmem>>, vector<8x256xf32>
      tpu.vector_store %arg7[%c0_23, %c0_24], %44 {strides = array<i32>} : memref<8x256xf32, #tpu.memory_space<vmem>>, vector<8x256xf32>,
    } else {
    }
    return
  }
  func.func @transform_0(%arg0: i32, %arg1: i32) -> (i32, i32, i32) {
    %c0_i32 = arith.constant 0 : i32
    %c0_i32_0 = arith.constant 0 : i32
    return %arg0, %arg1, %c0_i32 : i32, i32, i32
  }
  func.func @transform_1(%arg0: i32, %arg1: i32) -> (i32, i32) {
    %c0_i32 = arith.constant 0 : i32
    %c0_i32_0 = arith.constant 0 : i32
    %c0_i32_1 = arith.constant 0 : i32
    return %c0_i32, %c0_i32_0 : i32, i32
  }
  func.func @transform_2(%arg0: i32, %arg1: i32) -> (i32, i32) {
    %c0_i32 = arith.constant 0 : i32
    %c0_i32_0 = arith.constant 0 : i32
    %c0_i32_1 = arith.constant 0 : i32
    return %c0_i32, %c0_i32_0 : i32, i32
  }
  func.func @transform_3(%arg0: i32, %arg1: i32) -> (i32, i32) {
    %c0_i32 = arith.constant 0 : i32
    %c0_i32_0 = arith.constant 0 : i32
    %c0_i32_1 = arith.constant 0 : i32
    return %c0_i32, %c0_i32_0 : i32, i32
  }
  func.func @transform_4(%arg0: i32, %arg1: i32) -> (i32, i32) {
    %c0_i32 = arith.constant 0 : i32
    %c0_i32_0 = arith.constant 0 : i32
    %c0_i32_1 = arith.constant 0 : i32
    return %c0_i32, %c0_i32_0 : i32, i32
  }
  func.func @transform_5(%arg0: i32, %arg1: i32) -> (i32, i32) {
    %c0_i32 = arith.constant 0 : i32
    %c0_i32_0 = arith.constant 0 : i32
    %c0_i32_1 = arith.constant 0 : i32
    return %c0_i32, %c0_i32_0 : i32, i32
  }
}

</mosaic_0001>

<llo_original>
// kernel: tpu_custom_call.1
$region0: #{tpu_custom_call.1}
  #allocation0 [shape = 'u32[]', space=smem, size = 0x4, offset = 0x4, fixed_abs, tag = 'smem constant byte address 0x4 - core index']
  #allocation1 [shape = 'u32[144,128]{1,0:T(1,128)}', space=vmem, size = 0x12000, scoped, tag = 'internal scratch']
  %s0 = inlined_call_operand.vmem [shape: bf16[2,256,32], index: 0, kind: input, shape index: {}]
  %s1 = inlined_call_operand.vmem [shape: bf16[32,32], index: 1, kind: input, shape index: {}]
  %s2 = inlined_call_operand.vmem [shape: f32[1,32], index: 2, kind: input, shape index: {}]
  %s3 = inlined_call_operand.vmem [shape: bf16[32,256], index: 3, kind: input, shape index: {}]
  %s4 = inlined_call_operand.vmem [shape: f32[1,256], index: 4, kind: input, shape index: {}]
  %s5 = inlined_call_operand.hbm [shape: f32[8,256], index: 5, kind: output, shape index: {}]
  %s6 = sld [smem:[#allocation0]]
  $region61: #{tpu_custom_call.1} parent=0
    _
  %s8 = ssub.s32 1, %s6
  %s9 = scalar_select 0, %s8, %s6
  $region1: #{tpu_custom_call.1} parent=0
    #allocation2 [shape = 'u8[8192]{0}', space=vmem, size = 0x2000, scoped, tag = 'output window, operand 0, single buffered']
    #allocation3 [shape = 's32[2]{0}', space=sflag, size = 0x8, scoped, tag = 'scoped memory for tpu_custom_call.1']
    %10 = vsyncpa [#allocation3], 0
    loop: start=0, step=1, limit=4
    $region2: #{tpu_custom_call.1} parent=1 // loop_pre_header
      _
    $region3: #{tpu_custom_call.1} parent=1 // loop_header
      %s12 = sphi 0, %s16
      %p13 = scmp.ge.s32.totalorder %s12, 4
      %s19 = sphi 0, %s31
      %s20 = sphi 0, %s27
      %s21 = sphi 0, %s19
      %s22 = sphi 0, %s20
      %s23 = sphi 0, %s21
      %s24 = sphi 0, %s22
      %s36 = sphi 0, %s38
      %s39 = sphi 0, %s36
      %s40 = sphi 0, %s39
      %s56 = sphi 0, %s40
      %s60 = sphi 0, %s60
      %s62 = sphi 0, %s60
      %s63 = sphi 0, %s62
      %s77 = sphi 0, %s63
      %s81 = sphi 0, %s81
      %s83 = sphi 0, %s81
      %s84 = sphi 0, %s83
      %s98 = sphi 0, %s84
      %s102 = sphi 0, %s102
      %s104 = sphi 0, %s102
      %s105 = sphi 0, %s104
      %s119 = sphi 0, %s105
      %s123 = sphi 0, %s123
      %s125 = sphi 0, %s123
      %s126 = sphi 0, %s125
      %s140 = sphi 0, %s126
      %s144 = sphi 0, %s144
      %s146 = sphi 0, %s144
      %s147 = sphi 0, %s146
      %s161 = sphi 0, %s147
    $region4: #{tpu_custom_call.1} parent=1 // loop_header_branch
      %15 = sbr.rel (%p13) target = $region8
    $region5: #{tpu_custom_call.1} parent=1 // loop_body
      %s17 = ssub.s32 %s12, 1
      %s18 = ssub.s32 %s12, 2
      %s25 = sadd.s32 1, %s20
      %p26 = scmp.ge.s32.totalorder %s25, 1
      %s27 = scalar_select %p26, 0, %s25
      %s28 = sadd.s32 1, %s19
      %s29 = scalar_select %p26, %s28, %s19
      %p30 = scmp.ge.s32.totalorder %s29, 2
      %s31 = scalar_select %p30, 0, %s29
      %s32 = ssub.s32 %s19, %s31
      %s33 = ssub.s32 %s20, %s27
      %s34 = sor.u32 %s32, %s33
      %p35 = scmp.eq.s32.totalorder %s34, 0
      %s37 = sadd.s32 %s36, 1
      %s38 = scalar_select %p35, %s36, %s37
      %p41 = pneg %p35
      %p42 = scmp.eq.s32.totalorder %s12, 1
      %p43 = por %p41, %p42
      %p44 = scmp.ne.s32.totalorder %s36, %s39
      %p45 = scmp.eq.s32.totalorder %s12, 0
      %p46 = por %p44, %p45
      %p47 = scmp.ne.s32.totalorder %s36, %s39
      %p48 = scmp.eq.s32.totalorder %s17, 1
      %p49 = por %p47, %p48
      %p50 = scmp.ne.s32.totalorder %s39, %s40
      %p51 = scmp.eq.s32.totalorder %s17, 0
      %p52 = por %p50, %p51
      %p53 = scmp.ne.s32.totalorder %s39, %s40
      %p54 = scmp.eq.s32.totalorder %s18, 1
      %p55 = por %p53, %p54
      %p57 = scmp.ne.s32.totalorder %s40, %s56
      %p58 = scmp.eq.s32.totalorder %s18, 0
      %p59 = por %p57, %p58
      %s61 = sadd.s32 %s60, 1
      %p64 = scmp.eq.s32.totalorder %s12, 1
      %p65 = scmp.ne.s32.totalorder %s60, %s62
      %p66 = scmp.eq.s32.totalorder %s12, 0
      %p67 = por %p65, %p66
      %p68 = scmp.ne.s32.totalorder %s60, %s62
      %p69 = scmp.eq.s32.totalorder %s17, 1
      %p70 = por %p68, %p69
      %p71 = scmp.ne.s32.totalorder %s62, %s63
      %p72 = scmp.eq.s32.totalorder %s17, 0
      %p73 = por %p71, %p72
      %p74 = scmp.ne.s32.totalorder %s62, %s63
      %p75 = scmp.eq.s32.totalorder %s18, 1
      %p76 = por %p74, %p75
      %p78 = scmp.ne.s32.totalorder %s63, %s77
      %p79 = scmp.eq.s32.totalorder %s18, 0
      %p80 = por %p78, %p79
      %s82 = sadd.s32 %s81, 1
      %p85 = scmp.eq.s32.totalorder %s12, 1
      %p86 = scmp.ne.s32.totalorder %s81, %s83
      %p87 = scmp.eq.s32.totalorder %s12, 0
      %p88 = por %p86, %p87
      %p89 = scmp.ne.s32.totalorder %s81, %s83
      %p90 = scmp.eq.s32.totalorder %s17, 1
      %p91 = por %p89, %p90
      %p92 = scmp.ne.s32.totalorder %s83, %s84
      %p93 = scmp.eq.s32.totalorder %s17, 0
      %p94 = por %p92, %p93
      %p95 = scmp.ne.s32.totalorder %s83, %s84
      %p96 = scmp.eq.s32.totalorder %s18, 1
      %p97 = por %p95, %p96
      %p99 = scmp.ne.s32.totalorder %s84, %s98
      %p100 = scmp.eq.s32.totalorder %s18, 0
      %p101 = por %p99, %p100
      %s103 = sadd.s32 %s102, 1
      %p106 = scmp.eq.s32.totalorder %s12, 1
      %p107 = scmp.ne.s32.totalorder %s102, %s104
      %p108 = scmp.eq.s32.totalorder %s12, 0
      %p109 = por %p107, %p108
      %p110 = scmp.ne.s32.totalorder %s102, %s104
      %p111 = scmp.eq.s32.totalorder %s17, 1
      %p112 = por %p110, %p111
      %p113 = scmp.ne.s32.totalorder %s104, %s105
      %p114 = scmp.eq.s32.totalorder %s17, 0
      %p115 = por %p113, %p114
      %p116 = scmp.ne.s32.totalorder %s104, %s105
      %p117 = scmp.eq.s32.totalorder %s18, 1
      %p118 = por %p116, %p117
      %p120 = scmp.ne.s32.totalorder %s105, %s119
      %p121 = scmp.eq.s32.totalorder %s18, 0
      %p122 = por %p120, %p121
      %s124 = sadd.s32 %s123, 1
      %p127 = scmp.eq.s32.totalorder %s12, 1
      %p128 = scmp.ne.s32.totalorder %s123, %s125
      %p129 = scmp.eq.s32.totalorder %s12, 0
      %p130 = por %p128, %p129
      %p131 = scmp.ne.s32.totalorder %s123, %s125
      %p132 = scmp.eq.s32.totalorder %s17, 1
      %p133 = por %p131, %p132
      %p134 = scmp.ne.s32.totalorder %s125, %s126
      %p135 = scmp.eq.s32.totalorder %s17, 0
      %p136 = por %p134, %p135
      %p137 = scmp.ne.s32.totalorder %s125, %s126
      %p138 = scmp.eq.s32.totalorder %s18, 1
      %p139 = por %p137, %p138
      %p141 = scmp.ne.s32.totalorder %s126, %s140
      %p142 = scmp.eq.s32.totalorder %s18, 0
      %p143 = por %p141, %p142
      %s145 = sadd.s32 %s144, 1
      %p148 = scmp.eq.s32.totalorder %s12, 1
      %p149 = scmp.ne.s32.totalorder %s144, %s146
      %p150 = scmp.eq.s32.totalorder %s12, 0
      %p151 = por %p149, %p150
      %p152 = scmp.ne.s32.totalorder %s144, %s146
      %p153 = scmp.eq.s32.totalorder %s17, 1
      %p154 = por %p152, %p153
      %p155 = scmp.ne.s32.totalorder %s146, %s147
      %p156 = scmp.eq.s32.totalorder %s17, 0
      %p157 = por %p155, %p156
      %p158 = scmp.ne.s32.totalorder %s146, %s147
      %p159 = scmp.eq.s32.totalorder %s18, 1
      %p160 = por %p158, %p159
      %p162 = scmp.ne.s32.totalorder %s147, %s161
      %p163 = scmp.eq.s32.totalorder %s18, 0
      %p164 = por %p162, %p163
      %p165 = scmp.le.s32.totalorder 1, %s12
      %p166 = scmp.lt.s32.totalorder %s12, 3
      %p167 = pnand %p165, %p166
      %p168 = pneg %p167
      // Predicated region
      $region9: #{tpu_custom_call.1} parent=5 // pred_check
        _
      $region10: #{tpu_custom_call.1} parent=5 // pred_check_branch
        %170 = sbr.rel (%p167) target = $region12
      $region11: #{tpu_custom_call.1} parent=5 // pred_region
        %s171 = ssub.s32 %s12, 1
        // Predicated region
        $region13: #{tpu_custom_call.1} parent=11 // pred_check
          %p172 = pneg %p73
        $region14: #{tpu_custom_call.1} parent=11 // pred_check_branch
          %174 = sbr.rel (%p172) target = $region16
        $region15: #{tpu_custom_call.1} parent=11 // pred_region
          _
        $region16: #{tpu_custom_call.1} parent=11 // pred_fallthru
          _
        // Predicated region
        $region17: #{tpu_custom_call.1} parent=11 // pred_check
          %p175 = pneg %p94
        $region18: #{tpu_custom_call.1} parent=11 // pred_check_branch
          %177 = sbr.rel (%p175) target = $region20
        $region19: #{tpu_custom_call.1} parent=11 // pred_region
          _
        $region20: #{tpu_custom_call.1} parent=11 // pred_fallthru
          _
        // Predicated region
        $region21: #{tpu_custom_call.1} parent=11 // pred_check
          %p178 = pneg %p115
        $region22: #{tpu_custom_call.1} parent=11 // pred_check_branch
          %180 = sbr.rel (%p178) target = $region24
        $region23: #{tpu_custom_call.1} parent=11 // pred_region
          _
        $region24: #{tpu_custom_call.1} parent=11 // pred_fallthru
          _
        // Predicated region
        $region25: #{tpu_custom_call.1} parent=11 // pred_check
          %p181 = pneg %p136
        $region26: #{tpu_custom_call.1} parent=11 // pred_check_branch
          %183 = sbr.rel (%p181) target = $region28
        $region27: #{tpu_custom_call.1} parent=11 // pred_region
          _
        $region28: #{tpu_custom_call.1} parent=11 // pred_fallthru
          _
      $region12: #{tpu_custom_call.1} parent=5 // pred_fallthru
        _
      %p184 = scmp.lt.s32.totalorder %s12, 2
      // Predicated region
      $region29: #{tpu_custom_call.1} parent=5 // pred_check
        %p185 = pneg %p184
      $region30: #{tpu_custom_call.1} parent=5 // pred_check_branch
        %187 = sbr.rel (%p185) target = $region32
      $region31: #{tpu_custom_call.1} parent=5 // pred_region
        // Predicated region
        $region33: #{tpu_custom_call.1} parent=31 // pred_check
          %p188 = pneg %p46
        $region34: #{tpu_custom_call.1} parent=31 // pred_check_branch
          %190 = sbr.rel (%p188) target = $region36
        $region35: #{tpu_custom_call.1} parent=31 // pred_region
          %s191 = smul.u32 32, %s20
          %p192 = scmp.lt.s32.totalorder %s19, 1
          %s193 = scalar_select %p192, %s19, 1
          %p194 = scmp.lt.s32.totalorder %s191, 31
          %s195 = scalar_select %p194, %s191, 31
          %s196 = smul.addr %s193, 32
          %s197 = sadd.s32 %s195, %s196
          %s198 = smul.addr %s197, 4
          %s199 = scalar_lea.vmem %s0, %s198
          %s200 = smul.u32 32, %s20
        $region36: #{tpu_custom_call.1} parent=31 // pred_fallthru
          _
      $region32: #{tpu_custom_call.1} parent=5 // pred_fallthru
        _
      %p201 = scmp.le.s32.totalorder 1, %s12
      %p202 = scmp.lt.s32.totalorder %s12, 3
      %p203 = pnand %p201, %p202
      %p204 = pneg %p203
      // Predicated region
      $region37: #{tpu_custom_call.1} parent=5 // pred_check
        _
      $region38: #{tpu_custom_call.1} parent=5 // pred_check_branch
        %206 = sbr.rel (%p203) target = $region40
      $region39: #{tpu_custom_call.1} parent=5 // pred_region
        %s207 = ssub.s32 %s12, 1
        %s208 = smul.u32 32, %s22
        %p209 = scmp.lt.s32.totalorder %s21, 1
        %s210 = scalar_select %p209, %s21, 1
        %p211 = scmp.lt.s32.totalorder %s208, 31
        %s212 = scalar_select %p211, %s208, 31
        %s213 = smul.addr %s210, 32
        %s214 = sadd.s32 %s212, %s213
        %s215 = smul.addr %s214, 4
        %s216 = scalar_lea.vmem %s0, %s215
        %p217 = pneg %p52
        %p218 = pneg %p49
        %p219 = pneg %p73
        %p220 = pneg %p70
        %p221 = pneg %p94
        %p222 = pneg %p91
        %p223 = pneg %p115
        %p224 = pneg %p112
        %p225 = pneg %p136
        %p226 = pneg %p133
        %p227 = pneg %p157
        %p228 = pneg %p154
        %s229 = smul.u32 32, %s22
        %p230 = scmp.lt.s32.totalorder %s21, 1
        %s231 = scalar_select %p230, %s21, 1
        %p232 = scmp.lt.s32.totalorder %s229, 31
        %s233 = scalar_select %p232, %s229, 31
        %s234 = smul.addr %s231, 32
        %s235 = sadd.s32 %s233, %s234
        %s236 = smul.addr %s235, 4
        %s237 = scalar_lea.vmem %s0, %s236
        %s238 = smul.u32 32, %s22
        %p240 = scmp.eq.s32.totalorder %s21, 0
        %p241 = scmp.eq.s32.totalorder %s22, 0
        %p242 = pnand %p240, %p241
        %p243 = pneg %p242
        // Predicated region
        $region41: #{tpu_custom_call.1} parent=39 // pred_check
          _
        $region42: #{tpu_custom_call.1} parent=39 // pred_check_branch
          %245 = sbr.rel (%p242) target = $region44
        $region43: #{tpu_custom_call.1} parent=39 // pred_region
          %246 = vst [vmem:[#allocation2] sm:$0xff] 0.0
          %247 = vst [vmem:[#allocation2 + $0x8] sm:$0xff] 0.0
        $region44: #{tpu_custom_call.1} parent=39 // pred_fallthru
          _
        %v248 = vld [vmem:[%s237] sm:$0xf]
        %v249 = vld [vmem:[%s237 + $0x4] sm:$0xf]
        %v250 = vld [vmem:[%s237 + $0x8] sm:$0xf]
        %v251 = vld [vmem:[%s237 + $0xc] sm:$0xf]
        %v252 = vld [vmem:[%s237 + $0x10] sm:$0xf]
        %v253 = vld [vmem:[%s237 + $0x14] sm:$0xf]
        %v254 = vld [vmem:[%s237 + $0x18] sm:$0xf]
        %v255 = vld [vmem:[%s237 + $0x1c] sm:$0xf]
        %v256 = vld [vmem:[%s237 + $0x20] sm:$0xf]
        %v257 = vld [vmem:[%s237 + $0x24] sm:$0xf]
        %v258 = vld [vmem:[%s237 + $0x28] sm:$0xf]
        %v259 = vld [vmem:[%s237 + $0x2c] sm:$0xf]
        %v260 = vld [vmem:[%s237 + $0x30] sm:$0xf]
        %v261 = vld [vmem:[%s237 + $0x34] sm:$0xf]
        %v262 = vld [vmem:[%s237 + $0x38] sm:$0xf]
        %v263 = vld [vmem:[%s237 + $0x3c] sm:$0xf]
        %v264 = vld [vmem:[%s237 + $0x40] sm:$0xf]
        %v265 = vld [vmem:[%s237 + $0x44] sm:$0xf]
        %v266 = vld [vmem:[%s237 + $0x48] sm:$0xf]
        %v267 = vld [vmem:[%s237 + $0x4c] sm:$0xf]
        %v268 = vld [vmem:[%s237 + $0x50] sm:$0xf]
        %v269 = vld [vmem:[%s237 + $0x54] sm:$0xf]
        %v270 = vld [vmem:[%s237 + $0x58] sm:$0xf]
        %v271 = vld [vmem:[%s237 + $0x5c] sm:$0xf]
        %v272 = vld [vmem:[%s237 + $0x60] sm:$0xf]
        %v273 = vld [vmem:[%s237 + $0x64] sm:$0xf]
        %v274 = vld [vmem:[%s237 + $0x68] sm:$0xf]
        %v275 = vld [vmem:[%s237 + $0x6c] sm:$0xf]
        %v276 = vld [vmem:[%s237 + $0x70] sm:$0xf]
        %v277 = vld [vmem:[%s237 + $0x74] sm:$0xf]
        %v278 = vld [vmem:[%s237 + $0x78] sm:$0xf]
        %v279 = vld [vmem:[%s237 + $0x7c] sm:$0xf]
        %v280 = vld [vmem:[%s1] sm:$0xf]
        %v281 = vld [vmem:[%s1 + $0x4] sm:$0xf]
        %v282 = vld [vmem:[%s1 + $0x8] sm:$0xf]
        %v283 = vld [vmem:[%s1 + $0xc] sm:$0xf]
        %v284 = vld [vmem:[%s2] sm:$0x1]
        %v286 = vlaneseq
        %v287 = vshrl.u32 %v286, 7
        %v288 = vsub.s32 0, %v287
        %v289 = vrot.slane %v284, %v288
        %v323 = vunpack.c.l.b16 %v248
        %v324 = vunpack.c.l.b16 %v249
        %v325 = vunpack.c.l.b16 %v250
        %v326 = vunpack.c.l.b16 %v251
        %v327 = vunpack.c.l.b16 %v252
        %v328 = vunpack.c.l.b16 %v253
        %v329 = vunpack.c.l.b16 %v254
        %v330 = vunpack.c.l.b16 %v255
        %v331 = vunpack.c.l.b16 %v256
        %v332 = vunpack.c.l.b16 %v257
        %v333 = vunpack.c.l.b16 %v258
        %v334 = vunpack.c.l.b16 %v259
        %v335 = vunpack.c.l.b16 %v260
        %v336 = vunpack.c.l.b16 %v261
        %v337 = vunpack.c.l.b16 %v262
        %v338 = vunpack.c.l.b16 %v263
        %v339 = vunpack.c.l.b16 %v264
        %v340 = vunpack.c.l.b16 %v265
        %v341 = vunpack.c.l.b16 %v266
        %v342 = vunpack.c.l.b16 %v267
        %v343 = vunpack.c.l.b16 %v268
        %v344 = vunpack.c.l.b16 %v269
        %v345 = vunpack.c.l.b16 %v270
        %v346 = vunpack.c.l.b16 %v271
        %v347 = vunpack.c.l.b16 %v272
        %v348 = vunpack.c.l.b16 %v273
        %v349 = vunpack.c.l.b16 %v274
        %v350 = vunpack.c.l.b16 %v275
        %v351 = vunpack.c.l.b16 %v276
        %v352 = vunpack.c.l.b16 %v277
        %v353 = vunpack.c.l.b16 %v278
        %v354 = vunpack.c.l.b16 %v279
        %v355 = vpack.c.b16 %v324, %v323
        %v356 = vpack.c.b16 %v326, %v325
        %v357 = vpack.c.b16 %v328, %v327
        %v358 = vpack.c.b16 %v330, %v329
        %v359 = vpack.c.b16 %v332, %v331
        %v360 = vpack.c.b16 %v334, %v333
        %v361 = vpack.c.b16 %v336, %v335
        %v362 = vpack.c.b16 %v338, %v337
        %v363 = vpack.c.b16 %v340, %v339
        %v364 = vpack.c.b16 %v342, %v341
        %v365 = vpack.c.b16 %v344, %v343
        %v366 = vpack.c.b16 %v346, %v345
        %v367 = vpack.c.b16 %v348, %v347
        %v368 = vpack.c.b16 %v350, %v349
        %v369 = vpack.c.b16 %v352, %v351
        %v370 = vpack.c.b16 %v354, %v353
        %v375 = vunpack.c.l.b16 %v280
        %v376 = vunpack.c.l.b16 %v281
        %v377 = vunpack.c.l.b16 %v282
        %v378 = vunpack.c.l.b16 %v283
        %v379 = vpack.c.b16 %v376, %v375
        %v380 = vpack.c.b16 %v378, %v377
        %vm383 = vcmask 261120
        %v385 = vsel %vm383, %v355, 0
        %v388 = vsel %vm383, %v356, 0
        %v391 = vsel %vm383, %v357, 0
        %v394 = vsel %vm383, %v358, 0
        %v397 = vsel %vm383, %v359, 0
        %v400 = vsel %vm383, %v360, 0
        %v403 = vsel %vm383, %v361, 0
        %v406 = vsel %vm383, %v362, 0
        %v409 = vsel %vm383, %v363, 0
        %v412 = vsel %vm383, %v364, 0
        %v415 = vsel %vm383, %v365, 0
        %v418 = vsel %vm383, %v366, 0
        %v421 = vsel %vm383, %v367, 0
        %v424 = vsel %vm383, %v368, 0
        %v427 = vsel %vm383, %v369, 0
        %v430 = vsel %vm383, %v370, 0
        %432 = vmatprep.subr.bf16.mxu0 0
        %433 = vmatpush1.bf16.msra.mxu0 %v379
        %434 = vmatprep.subr.bf16.mxu0 0
        %435 = vmatpush1.bf16.msra.mxu0 %v380
        %436 = vmatprep.subr.bf16.mxu0 0
        %437 = vmatpush1.bf16.msra.mxu0 0
        %438 = vmatprep.subr.bf16.mxu0 0
        %439 = vmatpush1.bf16.msra.mxu0 0
        %440 = vmatprep.subr.bf16.mxu0 0
        %441 = vmatpush1.bf16.msra.mxu0 0
        %442 = vmatprep.subr.bf16.mxu0 0
        %443 = vmatpush1.bf16.msra.mxu0 0
        %444 = vmatprep.subr.bf16.mxu0 0
        %445 = vmatpush1.bf16.msra.mxu0 0
        %446 = vmatprep.subr.bf16.mxu0 0
        %447 = vmatpush1.bf16.msra.mxu0 0
        %448 = vmatprep.subr.bf16.mxu0 0
        %449 = vmatpush1.bf16.msra.mxu0 0
        %450 = vmatprep.subr.bf16.mxu0 0
        %451 = vmatpush1.bf16.msra.mxu0 0
        %452 = vmatprep.subr.bf16.mxu0 0
        %453 = vmatpush1.bf16.msra.mxu0 0
        %454 = vmatprep.subr.bf16.mxu0 0
        %455 = vmatpush1.bf16.msra.mxu0 0
        %456 = vmatprep.subr.bf16.mxu0 0
        %457 = vmatpush1.bf16.msra.mxu0 0
        %458 = vmatprep.subr.bf16.mxu0 0
        %459 = vmatpush1.bf16.msra.mxu0 0
        %460 = vmatprep.subr.bf16.mxu0 0
        %461 = vmatpush1.bf16.msra.mxu0 0
        %462 = vmatprep.subr.bf16.mxu0 0
        %463 = vmatpush1.bf16.msra.mxu0 0
        %464 = vmatprep.mubr.bf16.mxu0 0
        %465 = vmatmul.mubr.bf16.gmra.mrb[0].mxu0 %v385
        %v466 = vpop.f32.mrb[0].mxu0
        %v467 = vadd.f32 %v289, %v466
        %v468 = vpop.f32.mrb[0].mxu0
        %v469 = vpop.f32.mrb[0].mxu0
        %v470 = vadd.f32 %v289, %v469
        %v471 = vpop.f32.mrb[0].mxu0
        %472 = vmatprep.mubr.bf16.mxu0 0
        %473 = vmatmul.mubr.bf16.gmra.mrb[0].mxu0 %v388
        %v474 = vpop.f32.mrb[0].mxu0
        %v475 = vadd.f32 %v289, %v474
        %v476 = vpop.f32.mrb[0].mxu0
        %v477 = vpop.f32.mrb[0].mxu0
        %v478 = vadd.f32 %v289, %v477
        %v479 = vpop.f32.mrb[0].mxu0
        %480 = vmatprep.mubr.bf16.mxu0 0
        %481 = vmatmul.mubr.bf16.gmra.mrb[0].mxu0 %v391
        %v482 = vpop.f32.mrb[0].mxu0
        %v483 = vadd.f32 %v289, %v482
        %v484 = vpop.f32.mrb[0].mxu0
        %v485 = vpop.f32.mrb[0].mxu0
        %v486 = vadd.f32 %v289, %v485
        %v487 = vpop.f32.mrb[0].mxu0
        %488 = vmatprep.mubr.bf16.mxu0 0
        %489 = vmatmul.mubr.bf16.gmra.mrb[0].mxu0 %v394
        %v490 = vpop.f32.mrb[0].mxu0
        %v491 = vadd.f32 %v289, %v490
        %v492 = vpop.f32.mrb[0].mxu0
        %v493 = vpop.f32.mrb[0].mxu0
        %v494 = vadd.f32 %v289, %v493
        %v495 = vpop.f32.mrb[0].mxu0
        %496 = vmatprep.mubr.bf16.mxu0 0
        %497 = vmatmul.mubr.bf16.gmra.mrb[0].mxu0 %v397
        %v498 = vpop.f32.mrb[0].mxu0
        %v499 = vadd.f32 %v289, %v498
        %v500 = vpop.f32.mrb[0].mxu0
        %v501 = vpop.f32.mrb[0].mxu0
        %v502 = vadd.f32 %v289, %v501
        %v503 = vpop.f32.mrb[0].mxu0
        %504 = vmatprep.mubr.bf16.mxu0 0
        %505 = vmatmul.mubr.bf16.gmra.mrb[0].mxu0 %v400
        %v506 = vpop.f32.mrb[0].mxu0
        %v507 = vadd.f32 %v289, %v506
        %v508 = vpop.f32.mrb[0].mxu0
        %v509 = vpop.f32.mrb[0].mxu0
        %v510 = vadd.f32 %v289, %v509
        %v511 = vpop.f32.mrb[0].mxu0
        %512 = vmatprep.mubr.bf16.mxu0 0
        %513 = vmatmul.mubr.bf16.gmra.mrb[0].mxu0 %v403
        %v514 = vpop.f32.mrb[0].mxu0
        %v515 = vadd.f32 %v289, %v514
        %v516 = vpop.f32.mrb[0].mxu0
        %v517 = vpop.f32.mrb[0].mxu0
        %v518 = vadd.f32 %v289, %v517
        %v519 = vpop.f32.mrb[0].mxu0
        %520 = vmatprep.mubr.bf16.mxu0 0
        %521 = vmatmul.mubr.bf16.gmra.mrb[0].mxu0 %v406
        %v522 = vpop.f32.mrb[0].mxu0
        %v523 = vadd.f32 %v289, %v522
        %v524 = vpop.f32.mrb[0].mxu0
        %v525 = vpop.f32.mrb[0].mxu0
        %v526 = vadd.f32 %v289, %v525
        %v527 = vpop.f32.mrb[0].mxu0
        %528 = vmatprep.mubr.bf16.mxu0 0
        %529 = vmatmul.mubr.bf16.gmra.mrb[0].mxu0 %v409
        %v530 = vpop.f32.mrb[0].mxu0
        %v531 = vadd.f32 %v289, %v530
        %v532 = vpop.f32.mrb[0].mxu0
        %v533 = vpop.f32.mrb[0].mxu0
        %v534 = vadd.f32 %v289, %v533
        %v535 = vpop.f32.mrb[0].mxu0
        %536 = vmatprep.mubr.bf16.mxu0 0
        %537 = vmatmul.mubr.bf16.gmra.mrb[0].mxu0 %v412
        %v538 = vpop.f32.mrb[0].mxu0
        %v539 = vadd.f32 %v289, %v538
        %v540 = vpop.f32.mrb[0].mxu0
        %v541 = vpop.f32.mrb[0].mxu0
        %v542 = vadd.f32 %v289, %v541
        %v543 = vpop.f32.mrb[0].mxu0
        %544 = vmatprep.mubr.bf16.mxu0 0
        %545 = vmatmul.mubr.bf16.gmra.mrb[0].mxu0 %v415
        %v546 = vpop.f32.mrb[0].mxu0
        %v547 = vadd.f32 %v289, %v546
        %v548 = vpop.f32.mrb[0].mxu0
        %v549 = vpop.f32.mrb[0].mxu0
        %v550 = vadd.f32 %v289, %v549
        %v551 = vpop.f32.mrb[0].mxu0
        %552 = vmatprep.mubr.bf16.mxu0 0
        %553 = vmatmul.mubr.bf16.gmra.mrb[0].mxu0 %v418
        %v554 = vpop.f32.mrb[0].mxu0
        %v555 = vadd.f32 %v289, %v554
        %v556 = vpop.f32.mrb[0].mxu0
        %v557 = vpop.f32.mrb[0].mxu0
        %v558 = vadd.f32 %v289, %v557
        %v559 = vpop.f32.mrb[0].mxu0
        %560 = vmatprep.mubr.bf16.mxu0 0
        %561 = vmatmul.mubr.bf16.gmra.mrb[0].mxu0 %v421
        %v562 = vpop.f32.mrb[0].mxu0
        %v563 = vadd.f32 %v289, %v562
        %v564 = vpop.f32.mrb[0].mxu0
        %v565 = vpop.f32.mrb[0].mxu0
        %v566 = vadd.f32 %v289, %v565
        %v567 = vpop.f32.mrb[0].mxu0
        %568 = vmatprep.mubr.bf16.mxu0 0
        %569 = vmatmul.mubr.bf16.gmra.mrb[0].mxu0 %v424
        %v570 = vpop.f32.mrb[0].mxu0
        %v571 = vadd.f32 %v289, %v570
        %v572 = vpop.f32.mrb[0].mxu0
        %v573 = vpop.f32.mrb[0].mxu0
        %v574 = vadd.f32 %v289, %v573
        %v575 = vpop.f32.mrb[0].mxu0
        %576 = vmatprep.mubr.bf16.mxu0 0
        %577 = vmatmul.mubr.bf16.gmra.mrb[0].mxu0 %v427
        %v578 = vpop.f32.mrb[0].mxu0
        %v579 = vadd.f32 %v289, %v578
        %v580 = vpop.f32.mrb[0].mxu0
        %v581 = vpop.f32.mrb[0].mxu0
        %v582 = vadd.f32 %v289, %v581
        %v583 = vpop.f32.mrb[0].mxu0
        %584 = vmatprep.mubr.bf16.mxu0 0
        %585 = vmatmul.mubr.bf16.gmra.mrb[0].mxu0 %v430
        %v586 = vpop.f32.mrb[0].mxu0
        %v587 = vadd.f32 %v289, %v586
        %v588 = vpop.f32.mrb[0].mxu0
        %v589 = vpop.f32.mrb[0].mxu0
        %v590 = vadd.f32 %v289, %v589
        %v591 = vpop.f32.mrb[0].mxu0
        %592 = vdwg.mxu0
        %v593 = vxor.u32 %v467, 2147483648
        %v594 = vxor.u32 %v470, 2147483648
        %v595 = vxor.u32 %v475, 2147483648
        %v596 = vxor.u32 %v478, 2147483648
        %v597 = vxor.u32 %v483, 2147483648
        %v598 = vxor.u32 %v486, 2147483648
        %v599 = vxor.u32 %v491, 2147483648
        %v600 = vxor.u32 %v494, 2147483648
        %v601 = vxor.u32 %v499, 2147483648
        %v602 = vxor.u32 %v502, 2147483648
        %v603 = vxor.u32 %v507, 2147483648
        %v604 = vxor.u32 %v510, 2147483648
        %v605 = vxor.u32 %v515, 2147483648
        %v606 = vxor.u32 %v518, 2147483648
        %v607 = vxor.u32 %v523, 2147483648
        %v608 = vxor.u32 %v526, 2147483648
        %v609 = vxor.u32 %v531, 2147483648
        %v610 = vxor.u32 %v534, 2147483648
        %v611 = vxor.u32 %v539, 2147483648
        %v612 = vxor.u32 %v542, 2147483648
        %v613 = vxor.u32 %v547, 2147483648
        %v614 = vxor.u32 %v550, 2147483648
        %v615 = vxor.u32 %v555, 2147483648
        %v616 = vxor.u32 %v558, 2147483648
        %v617 = vxor.u32 %v563, 2147483648
        %v618 = vxor.u32 %v566, 2147483648
        %v619 = vxor.u32 %v571, 2147483648
        %v620 = vxor.u32 %v574, 2147483648
        %v621 = vxor.u32 %v579, 2147483648
        %v622 = vxor.u32 %v582, 2147483648
        %v623 = vxor.u32 %v587, 2147483648
        %v624 = vxor.u32 %v590, 2147483648
        %v625 = vmul.f32 %v593, 1.442695
        %v626 = vpow.pop %v625
        %v627 = vmul.f32 %v594, 1.442695
        %v628 = vpow.pop %v627
        %v629 = vmul.f32 %v595, 1.442695
        %v630 = vpow.pop %v629
        %v631 = vmul.f32 %v596, 1.442695
        %v632 = vpow.pop %v631
        %v633 = vmul.f32 %v597, 1.442695
        %v634 = vpow.pop %v633
        %v635 = vmul.f32 %v598, 1.442695
        %v636 = vpow.pop %v635
        %v637 = vmul.f32 %v599, 1.442695
        %v638 = vpow.pop %v637
        %v639 = vmul.f32 %v600, 1.442695
        %v640 = vpow.pop %v639
        %v641 = vmul.f32 %v601, 1.442695
        %v642 = vpow.pop %v641
        %v643 = vmul.f32 %v602, 1.442695
        %v644 = vpow.pop %v643
        %v645 = vmul.f32 %v603, 1.442695
        %v646 = vpow.pop %v645
        %v647 = vmul.f32 %v604, 1.442695
        %v648 = vpow.pop %v647
        %v649 = vmul.f32 %v605, 1.442695
        %v650 = vpow.pop %v649
        %v651 = vmul.f32 %v606, 1.442695
        %v652 = vpow.pop %v651
        %v653 = vmul.f32 %v607, 1.442695
        %v654 = vpow.pop %v653
        %v655 = vmul.f32 %v608, 1.442695
        %v656 = vpow.pop %v655
        %v657 = vmul.f32 %v609, 1.442695
        %v658 = vpow.pop %v657
        %v659 = vmul.f32 %v610, 1.442695
        %v660 = vpow.pop %v659
        %v661 = vmul.f32 %v611, 1.442695
        %v662 = vpow.pop %v661
        %v663 = vmul.f32 %v612, 1.442695
        %v664 = vpow.pop %v663
        %v665 = vmul.f32 %v613, 1.442695
        %v666 = vpow.pop %v665
        %v667 = vmul.f32 %v614, 1.442695
        %v668 = vpow.pop %v667
        %v669 = vmul.f32 %v615, 1.442695
        %v670 = vpow.pop %v669
        %v671 = vmul.f32 %v616, 1.442695
        %v672 = vpow.pop %v671
        %v673 = vmul.f32 %v617, 1.442695
        %v674 = vpow.pop %v673
        %v675 = vmul.f32 %v618, 1.442695
        %v676 = vpow.pop %v675
        %v677 = vmul.f32 %v619, 1.442695
        %v678 = vpow.pop %v677
        %v679 = vmul.f32 %v620, 1.442695
        %v680 = vpow.pop %v679
        %v681 = vmul.f32 %v621, 1.442695
        %v682 = vpow.pop %v681
        %v683 = vmul.f32 %v622, 1.442695
        %v684 = vpow.pop %v683
        %v685 = vmul.f32 %v623, 1.442695
        %v686 = vpow.pop %v685
        %v687 = vmul.f32 %v624, 1.442695
        %v688 = vpow.pop %v687
        %v689 = vadd.f32 %v626, 1.0
        %v690 = vadd.f32 %v628, 1.0
        %v691 = vadd.f32 %v630, 1.0
        %v692 = vadd.f32 %v632, 1.0
        %v693 = vadd.f32 %v634, 1.0
        %v694 = vadd.f32 %v636, 1.0
        %v695 = vadd.f32 %v638, 1.0
        %v696 = vadd.f32 %v640, 1.0
        %v697 = vadd.f32 %v642, 1.0
        %v698 = vadd.f32 %v644, 1.0
        %v699 = vadd.f32 %v646, 1.0
        %v700 = vadd.f32 %v648, 1.0
        %v701 = vadd.f32 %v650, 1.0
        %v702 = vadd.f32 %v652, 1.0
        %v703 = vadd.f32 %v654, 1.0
        %v704 = vadd.f32 %v656, 1.0
        %v705 = vadd.f32 %v658, 1.0
        %v706 = vadd.f32 %v660, 1.0
        %v707 = vadd.f32 %v662, 1.0
        %v708 = vadd.f32 %v664, 1.0
        %v709 = vadd.f32 %v666, 1.0
        %v710 = vadd.f32 %v668, 1.0
        %v711 = vadd.f32 %v670, 1.0
        %v712 = vadd.f32 %v672, 1.0
        %v713 = vadd.f32 %v674, 1.0
        %v714 = vadd.f32 %v676, 1.0
        %v715 = vadd.f32 %v678, 1.0
        %v716 = vadd.f32 %v680, 1.0
        %v717 = vadd.f32 %v682, 1.0
        %v718 = vadd.f32 %v684, 1.0
        %v719 = vadd.f32 %v686, 1.0
        %v720 = vadd.f32 %v688, 1.0
        %v721 = vrcp.pop %v689
        %v722 = vmul.f32 1.0, %v721
        %v723 = vrcp.pop %v690
        %v724 = vmul.f32 1.0, %v723
        %v725 = vrcp.pop %v691
        %v726 = vmul.f32 1.0, %v725
        %v727 = vrcp.pop %v692
        %v728 = vmul.f32 1.0, %v727
        %v729 = vrcp.pop %v693
        %v730 = vmul.f32 1.0, %v729
        %v731 = vrcp.pop %v694
        %v732 = vmul.f32 1.0, %v731
        %v733 = vrcp.pop %v695
        %v734 = vmul.f32 1.0, %v733
        %v735 = vrcp.pop %v696
        %v736 = vmul.f32 1.0, %v735
        %v737 = vrcp.pop %v697
        %v738 = vmul.f32 1.0, %v737
        %v739 = vrcp.pop %v698
        %v740 = vmul.f32 1.0, %v739
        %v741 = vrcp.pop %v699
        %v742 = vmul.f32 1.0, %v741
        %v743 = vrcp.pop %v700
        %v744 = vmul.f32 1.0, %v743
        %v745 = vrcp.pop %v701
        %v746 = vmul.f32 1.0, %v745
        %v747 = vrcp.pop %v702
        %v748 = vmul.f32 1.0, %v747
        %v749 = vrcp.pop %v703
        %v750 = vmul.f32 1.0, %v749
        %v751 = vrcp.pop %v704
        %v752 = vmul.f32 1.0, %v751
        %v753 = vrcp.pop %v705
        %v754 = vmul.f32 1.0, %v753
        %v755 = vrcp.pop %v706
        %v756 = vmul.f32 1.0, %v755
        %v757 = vrcp.pop %v707
        %v758 = vmul.f32 1.0, %v757
        %v759 = vrcp.pop %v708
        %v760 = vmul.f32 1.0, %v759
        %v761 = vrcp.pop %v709
        %v762 = vmul.f32 1.0, %v761
        %v763 = vrcp.pop %v710
        %v764 = vmul.f32 1.0, %v763
        %v765 = vrcp.pop %v711
        %v766 = vmul.f32 1.0, %v765
        %v767 = vrcp.pop %v712
        %v768 = vmul.f32 1.0, %v767
        %v769 = vrcp.pop %v713
        %v770 = vmul.f32 1.0, %v769
        %v771 = vrcp.pop %v714
        %v772 = vmul.f32 1.0, %v771
        %v773 = vrcp.pop %v715
        %v774 = vmul.f32 1.0, %v773
        %v775 = vrcp.pop %v716
        %v776 = vmul.f32 1.0, %v775
        %v777 = vrcp.pop %v717
        %v778 = vmul.f32 1.0, %v777
        %v779 = vrcp.pop %v718
        %v780 = vmul.f32 1.0, %v779
        %v781 = vrcp.pop %v719
        %v782 = vmul.f32 1.0, %v781
        %v783 = vrcp.pop %v720
        %v784 = vmul.f32 1.0, %v783
        %v785 = vmul.f32 %v467, %v722
        %v786 = vmul.f32 %v470, %v724
        %v787 = vmul.f32 %v475, %v726
        %v788 = vmul.f32 %v478, %v728
        %v789 = vmul.f32 %v483, %v730
        %v790 = vmul.f32 %v486, %v732
        %v791 = vmul.f32 %v491, %v734
        %v792 = vmul.f32 %v494, %v736
        %v793 = vmul.f32 %v499, %v738
        %v794 = vmul.f32 %v502, %v740
        %v795 = vmul.f32 %v507, %v742
        %v796 = vmul.f32 %v510, %v744
        %v797 = vmul.f32 %v515, %v746
        %v798 = vmul.f32 %v518, %v748
        %v799 = vmul.f32 %v523, %v750
        %v800 = vmul.f32 %v526, %v752
        %v801 = vmul.f32 %v531, %v754
        %v802 = vmul.f32 %v534, %v756
        %v803 = vmul.f32 %v539, %v758
        %v804 = vmul.f32 %v542, %v760
        %v805 = vmul.f32 %v547, %v762
        %v806 = vmul.f32 %v550, %v764
        %v807 = vmul.f32 %v555, %v766
        %v808 = vmul.f32 %v558, %v768
        %v809 = vmul.f32 %v563, %v770
        %v810 = vmul.f32 %v566, %v772
        %v811 = vmul.f32 %v571, %v774
        %v812 = vmul.f32 %v574, %v776
        %v813 = vmul.f32 %v579, %v778
        %v814 = vmul.f32 %v582, %v780
        %v815 = vmul.f32 %v587, %v782
        %v816 = vmul.f32 %v590, %v784
        %v817 = vpack.c.bf16 %v786, %v785
        %v818 = vpack.c.bf16 %v788, %v787
        %v819 = vpack.c.bf16 %v790, %v789
        %v820 = vpack.c.bf16 %v792, %v791
        %v821 = vpack.c.bf16 %v794, %v793
        %v822 = vpack.c.bf16 %v796, %v795
        %v823 = vpack.c.bf16 %v798, %v797
        %v824 = vpack.c.bf16 %v800, %v799
        %v825 = vpack.c.bf16 %v802, %v801
        %v826 = vpack.c.bf16 %v804, %v803
        %v827 = vpack.c.bf16 %v806, %v805
        %v828 = vpack.c.bf16 %v808, %v807
        %v829 = vpack.c.bf16 %v810, %v809
        %v830 = vpack.c.bf16 %v812, %v811
        %v831 = vpack.c.bf16 %v814, %v813
        %v832 = vpack.c.bf16 %v816, %v815
        %v833 = vld [vmem:[%s3] sm:$0xff]
        %v834 = vld [vmem:[%s3 + $0x8] sm:$0xff]
        %v835 = vld [vmem:[%s3 + $0x10] sm:$0xff]
        %v836 = vld [vmem:[%s3 + $0x18] sm:$0xff]
        %v837 = vld [vmem:[%s4] sm:$0x3]
        %v839 = vlaneseq
        %v840 = vshrl.u32 %v839, 7
        %v841 = vsub.s32 0, %v840
        %v842 = vrot.slane %v837, %v841
        %v843 = vlaneseq
        %v844 = vshrl.u32 %v843, 7
        %v845 = vsub.s32 1, %v844
        %v846 = vrot.slane %v837, %v845
        %v853 = vunpack.c.l.b16 %v833
        %v854 = vunpack.c.h.b16 %v833
        %v855 = vunpack.c.l.b16 %v834
        %v856 = vunpack.c.h.b16 %v834
        %v857 = vunpack.c.l.b16 %v835
        %v858 = vunpack.c.h.b16 %v835
        %v859 = vunpack.c.l.b16 %v836
        %v860 = vunpack.c.h.b16 %v836
        %v861 = vpack.c.b16 %v855, %v853
        %v862 = vpack.c.b16 %v856, %v854
        %v863 = vpack.c.b16 %v859, %v857
        %v864 = vpack.c.b16 %v860, %v858
        %v870 = vsel %vm383, %v817, 0
        %v873 = vsel %vm383, %v818, 0
        %v876 = vsel %vm383, %v819, 0
        %v879 = vsel %vm383, %v820, 0
        %v882 = vsel %vm383, %v821, 0
        %v885 = vsel %vm383, %v822, 0
        %v888 = vsel %vm383, %v823, 0
        %v891 = vsel %vm383, %v824, 0
        %v894 = vsel %vm383, %v825, 0
        %v897 = vsel %vm383, %v826, 0
        %v900 = vsel %vm383, %v827, 0
        %v903 = vsel %vm383, %v828, 0
        %v906 = vsel %vm383, %v829, 0
        %v909 = vsel %vm383, %v830, 0
        %v912 = vsel %vm383, %v831, 0
        %v915 = vsel %vm383, %v832, 0
        %917 = vmatprep.subr.bf16.mxu0 %v862
        %918 = vmatpush1.bf16.msra.mxu0 %v861
        %919 = vmatprep.subr.bf16.mxu0 %v864
        %920 = vmatpush1.bf16.msra.mxu0 %v863
        %921 = vmatprep.subr.bf16.mxu0 0
        %922 = vmatpush1.bf16.msra.mxu0 0
        %923 = vmatprep.subr.bf16.mxu0 0
        %924 = vmatpush1.bf16.msra.mxu0 0
        %925 = vmatprep.subr.bf16.mxu0 0
        %926 = vmatpush1.bf16.msra.mxu0 0
        %927 = vmatprep.subr.bf16.mxu0 0
        %928 = vmatpush1.bf16.msra.mxu0 0
        %929 = vmatprep.subr.bf16.mxu0 0
        %930 = vmatpush1.bf16.msra.mxu0 0
        %931 = vmatprep.subr.bf16.mxu0 0
        %932 = vmatpush1.bf16.msra.mxu0 0
        %933 = vmatprep.subr.bf16.mxu0 0
        %934 = vmatpush1.bf16.msra.mxu0 0
        %935 = vmatprep.subr.bf16.mxu0 0
        %936 = vmatpush1.bf16.msra.mxu0 0
        %937 = vmatprep.subr.bf16.mxu0 0
        %938 = vmatpush1.bf16.msra.mxu0 0
        %939 = vmatprep.subr.bf16.mxu0 0
        %940 = vmatpush1.bf16.msra.mxu0 0
        %941 = vmatprep.subr.bf16.mxu0 0
        %942 = vmatpush1.bf16.msra.mxu0 0
        %943 = vmatprep.subr.bf16.mxu0 0
        %944 = vmatpush1.bf16.msra.mxu0 0
        %945 = vmatprep.subr.bf16.mxu0 0
        %946 = vmatpush1.bf16.msra.mxu0 0
        %947 = vmatprep.subr.bf16.mxu0 0
        %948 = vmatpush1.bf16.msra.mxu0 0
        %949 = vmatprep.mubr.bf16.mxu0 0
        %950 = vmatmul.mubr.bf16.gmra.mrb[0].mxu0 %v870
        %v951 = vpop.f32.mrb[0].mxu0
        %v952 = vadd.f32 %v842, %v951
        %v953 = vpop.f32.mrb[0].mxu0
        %v954 = vadd.f32 %v846, %v953
        %v955 = vpop.f32.mrb[0].mxu0
        %v956 = vadd.f32 %v842, %v955
        %v957 = vpop.f32.mrb[0].mxu0
        %v958 = vadd.f32 %v846, %v957
        %959 = vmatprep.mubr.bf16.mxu0 0
        %960 = vmatmul.mubr.bf16.gmra.mrb[0].mxu0 %v873
        %v961 = vpop.f32.mrb[0].mxu0
        %v962 = vadd.f32 %v842, %v961
        %v963 = vpop.f32.mrb[0].mxu0
        %v964 = vadd.f32 %v846, %v963
        %v965 = vpop.f32.mrb[0].mxu0
        %v966 = vadd.f32 %v842, %v965
        %v967 = vpop.f32.mrb[0].mxu0
        %v968 = vadd.f32 %v846, %v967
        %969 = vmatprep.mubr.bf16.mxu0 0
        %970 = vmatmul.mubr.bf16.gmra.mrb[0].mxu0 %v876
        %v971 = vpop.f32.mrb[0].mxu0
        %v972 = vadd.f32 %v842, %v971
        %v973 = vpop.f32.mrb[0].mxu0
        %v974 = vadd.f32 %v846, %v973
        %v975 = vpop.f32.mrb[0].mxu0
        %v976 = vadd.f32 %v842, %v975
        %v977 = vpop.f32.mrb[0].mxu0
        %v978 = vadd.f32 %v846, %v977
        %979 = vmatprep.mubr.bf16.mxu0 0
        %980 = vmatmul.mubr.bf16.gmra.mrb[0].mxu0 %v879
        %v981 = vpop.f32.mrb[0].mxu0
        %v982 = vadd.f32 %v842, %v981
        %v983 = vpop.f32.mrb[0].mxu0
        %v984 = vadd.f32 %v846, %v983
        %v985 = vpop.f32.mrb[0].mxu0
        %v986 = vadd.f32 %v842, %v985
        %v987 = vpop.f32.mrb[0].mxu0
        %v988 = vadd.f32 %v846, %v987
        %989 = vmatprep.mubr.bf16.mxu0 0
        %990 = vmatmul.mubr.bf16.gmra.mrb[0].mxu0 %v882
        %v991 = vpop.f32.mrb[0].mxu0
        %v992 = vadd.f32 %v842, %v991
        %v993 = vpop.f32.mrb[0].mxu0
        %v994 = vadd.f32 %v846, %v993
        %v995 = vpop.f32.mrb[0].mxu0
        %v996 = vadd.f32 %v842, %v995
        %v997 = vpop.f32.mrb[0].mxu0
        %v998 = vadd.f32 %v846, %v997
        %999 = vmatprep.mubr.bf16.mxu0 0
        %1000 = vmatmul.mubr.bf16.gmra.mrb[0].mxu0 %v885
        %v1001 = vpop.f32.mrb[0].mxu0
        %v1002 = vadd.f32 %v842, %v1001
        %v1003 = vpop.f32.mrb[0].mxu0
        %v1004 = vadd.f32 %v846, %v1003
        %v1005 = vpop.f32.mrb[0].mxu0
        %v1006 = vadd.f32 %v842, %v1005
        %v1007 = vpop.f32.mrb[0].mxu0
        %v1008 = vadd.f32 %v846, %v1007
        %1009 = vmatprep.mubr.bf16.mxu0 0
        %1010 = vmatmul.mubr.bf16.gmra.mrb[0].mxu0 %v888
        %v1011 = vpop.f32.mrb[0].mxu0
        %v1012 = vadd.f32 %v842, %v1011
        %v1013 = vpop.f32.mrb[0].mxu0
        %v1014 = vadd.f32 %v846, %v1013
        %v1015 = vpop.f32.mrb[0].mxu0
        %v1016 = vadd.f32 %v842, %v1015
        %v1017 = vpop.f32.mrb[0].mxu0
        %v1018 = vadd.f32 %v846, %v1017
        %1019 = vmatprep.mubr.bf16.mxu0 0
        %1020 = vmatmul.mubr.bf16.gmra.mrb[0].mxu0 %v891
        %v1021 = vpop.f32.mrb[0].mxu0
        %v1022 = vadd.f32 %v842, %v1021
        %v1023 = vpop.f32.mrb[0].mxu0
        %v1024 = vadd.f32 %v846, %v1023
        %v1025 = vpop.f32.mrb[0].mxu0
        %v1026 = vadd.f32 %v842, %v1025
        %v1027 = vpop.f32.mrb[0].mxu0
        %v1028 = vadd.f32 %v846, %v1027
        %1029 = vmatprep.mubr.bf16.mxu0 0
        %1030 = vmatmul.mubr.bf16.gmra.mrb[0].mxu0 %v894
        %v1031 = vpop.f32.mrb[0].mxu0
        %v1032 = vadd.f32 %v842, %v1031
        %v1033 = vpop.f32.mrb[0].mxu0
        %v1034 = vadd.f32 %v846, %v1033
        %v1035 = vpop.f32.mrb[0].mxu0
        %v1036 = vadd.f32 %v842, %v1035
        %v1037 = vpop.f32.mrb[0].mxu0
        %v1038 = vadd.f32 %v846, %v1037
        %1039 = vmatprep.mubr.bf16.mxu0 0
        %1040 = vmatmul.mubr.bf16.gmra.mrb[0].mxu0 %v897
        %v1041 = vpop.f32.mrb[0].mxu0
        %v1042 = vadd.f32 %v842, %v1041
        %v1043 = vpop.f32.mrb[0].mxu0
        %v1044 = vadd.f32 %v846, %v1043
        %v1045 = vpop.f32.mrb[0].mxu0
        %v1046 = vadd.f32 %v842, %v1045
        %v1047 = vpop.f32.mrb[0].mxu0
        %v1048 = vadd.f32 %v846, %v1047
        %1049 = vmatprep.mubr.bf16.mxu0 0
        %1050 = vmatmul.mubr.bf16.gmra.mrb[0].mxu0 %v900
        %v1051 = vpop.f32.mrb[0].mxu0
        %v1052 = vadd.f32 %v842, %v1051
        %v1053 = vpop.f32.mrb[0].mxu0
        %v1054 = vadd.f32 %v846, %v1053
        %v1055 = vpop.f32.mrb[0].mxu0
        %v1056 = vadd.f32 %v842, %v1055
        %v1057 = vpop.f32.mrb[0].mxu0
        %v1058 = vadd.f32 %v846, %v1057
        %1059 = vmatprep.mubr.bf16.mxu0 0
        %1060 = vmatmul.mubr.bf16.gmra.mrb[0].mxu0 %v903
        %v1061 = vpop.f32.mrb[0].mxu0
        %v1062 = vadd.f32 %v842, %v1061
        %v1063 = vpop.f32.mrb[0].mxu0
        %v1064 = vadd.f32 %v846, %v1063
        %v1065 = vpop.f32.mrb[0].mxu0
        %v1066 = vadd.f32 %v842, %v1065
        %v1067 = vpop.f32.mrb[0].mxu0
        %v1068 = vadd.f32 %v846, %v1067
        %1069 = vmatprep.mubr.bf16.mxu0 0
        %1070 = vmatmul.mubr.bf16.gmra.mrb[0].mxu0 %v906
        %v1071 = vpop.f32.mrb[0].mxu0
        %v1072 = vadd.f32 %v842, %v1071
        %v1073 = vpop.f32.mrb[0].mxu0
        %v1074 = vadd.f32 %v846, %v1073
        %v1075 = vpop.f32.mrb[0].mxu0
        %v1076 = vadd.f32 %v842, %v1075
        %v1077 = vpop.f32.mrb[0].mxu0
        %v1078 = vadd.f32 %v846, %v1077
        %1079 = vmatprep.mubr.bf16.mxu0 0
        %1080 = vmatmul.mubr.bf16.gmra.mrb[0].mxu0 %v909
        %v1081 = vpop.f32.mrb[0].mxu0
        %v1082 = vadd.f32 %v842, %v1081
        %v1083 = vpop.f32.mrb[0].mxu0
        %v1084 = vadd.f32 %v846, %v1083
        %v1085 = vpop.f32.mrb[0].mxu0
        %v1086 = vadd.f32 %v842, %v1085
        %v1087 = vpop.f32.mrb[0].mxu0
        %v1088 = vadd.f32 %v846, %v1087
        %1089 = vmatprep.mubr.bf16.mxu0 0
        %1090 = vmatmul.mubr.bf16.gmra.mrb[0].mxu0 %v912
        %v1091 = vpop.f32.mrb[0].mxu0
        %v1092 = vadd.f32 %v842, %v1091
        %v1093 = vpop.f32.mrb[0].mxu0
        %v1094 = vadd.f32 %v846, %v1093
        %v1095 = vpop.f32.mrb[0].mxu0
        %v1096 = vadd.f32 %v842, %v1095
        %v1097 = vpop.f32.mrb[0].mxu0
        %v1098 = vadd.f32 %v846, %v1097
        %1099 = vmatprep.mubr.bf16.mxu0 0
        %1100 = vmatmul.mubr.bf16.gmra.mrb[0].mxu0 %v915
        %v1101 = vpop.f32.mrb[0].mxu0
        %v1102 = vadd.f32 %v842, %v1101
        %v1103 = vpop.f32.mrb[0].mxu0
        %v1104 = vadd.f32 %v846, %v1103
        %v1105 = vpop.f32.mrb[0].mxu0
        %v1106 = vadd.f32 %v842, %v1105
        %v1107 = vpop.f32.mrb[0].mxu0
        %v1108 = vadd.f32 %v846, %v1107
        %1109 = vdwg.mxu0
        %v1110 = vxor.u32 %v952, 2147483648
        %v1111 = vxor.u32 %v954, 2147483648
        %v1112 = vxor.u32 %v956, 2147483648
        %v1113 = vxor.u32 %v958, 2147483648
        %v1114 = vxor.u32 %v962, 2147483648
        %v1115 = vxor.u32 %v964, 2147483648
        %v1116 = vxor.u32 %v966, 2147483648
        %v1117 = vxor.u32 %v968, 2147483648
        %v1118 = vxor.u32 %v972, 2147483648
        %v1119 = vxor.u32 %v974, 2147483648
        %v1120 = vxor.u32 %v976, 2147483648
        %v1121 = vxor.u32 %v978, 2147483648
        %v1122 = vxor.u32 %v982, 2147483648
        %v1123 = vxor.u32 %v984, 2147483648
        %v1124 = vxor.u32 %v986, 2147483648
        %v1125 = vxor.u32 %v988, 2147483648
        %v1126 = vxor.u32 %v992, 2147483648
        %v1127 = vxor.u32 %v994, 2147483648
        %v1128 = vxor.u32 %v996, 2147483648
        %v1129 = vxor.u32 %v998, 2147483648
        %v1130 = vxor.u32 %v1002, 2147483648
        %v1131 = vxor.u32 %v1004, 2147483648
        %v1132 = vxor.u32 %v1006, 2147483648
        %v1133 = vxor.u32 %v1008, 2147483648
        %v1134 = vxor.u32 %v1012, 2147483648
        %v1135 = vxor.u32 %v1014, 2147483648
        %v1136 = vxor.u32 %v1016, 2147483648
        %v1137 = vxor.u32 %v1018, 2147483648
        %v1138 = vxor.u32 %v1022, 2147483648
        %v1139 = vxor.u32 %v1024, 2147483648
        %v1140 = vxor.u32 %v1026, 2147483648
        %v1141 = vxor.u32 %v1028, 2147483648
        %v1142 = vxor.u32 %v1032, 2147483648
        %v1143 = vxor.u32 %v1034, 2147483648
        %v1144 = vxor.u32 %v1036, 2147483648
        %v1145 = vxor.u32 %v1038, 2147483648
        %v1146 = vxor.u32 %v1042, 2147483648
        %v1147 = vxor.u32 %v1044, 2147483648
        %v1148 = vxor.u32 %v1046, 2147483648
        %v1149 = vxor.u32 %v1048, 2147483648
        %v1150 = vxor.u32 %v1052, 2147483648
        %v1151 = vxor.u32 %v1054, 2147483648
        %v1152 = vxor.u32 %v1056, 2147483648
        %v1153 = vxor.u32 %v1058, 2147483648
        %v1154 = vxor.u32 %v1062, 2147483648
        %v1155 = vxor.u32 %v1064, 2147483648
        %v1156 = vxor.u32 %v1066, 2147483648
        %v1157 = vxor.u32 %v1068, 2147483648
        %v1158 = vxor.u32 %v1072, 2147483648
        %v1159 = vxor.u32 %v1074, 2147483648
        %v1160 = vxor.u32 %v1076, 2147483648
        %v1161 = vxor.u32 %v1078, 2147483648
        %v1162 = vxor.u32 %v1082, 2147483648
        %v1163 = vxor.u32 %v1084, 2147483648
        %v1164 = vxor.u32 %v1086, 2147483648
        %v1165 = vxor.u32 %v1088, 2147483648
        %v1166 = vxor.u32 %v1092, 2147483648
        %v1167 = vxor.u32 %v1094, 2147483648
        %v1168 = vxor.u32 %v1096, 2147483648
        %v1169 = vxor.u32 %v1098, 2147483648
        %v1170 = vxor.u32 %v1102, 2147483648
        %v1171 = vxor.u32 %v1104, 2147483648
        %v1172 = vxor.u32 %v1106, 2147483648
        %v1173 = vxor.u32 %v1108, 2147483648
        %v1174 = vmul.f32 %v1110, 1.442695
        %v1175 = vpow.pop %v1174
        %v1176 = vmul.f32 %v1111, 1.442695
        %v1177 = vpow.pop %v1176
        %v1178 = vmul.f32 %v1112, 1.442695
        %v1179 = vpow.pop %v1178
        %v1180 = vmul.f32 %v1113, 1.442695
        %v1181 = vpow.pop %v1180
        %v1182 = vmul.f32 %v1114, 1.442695
        %v1183 = vpow.pop %v1182
        %v1184 = vmul.f32 %v1115, 1.442695
        %v1185 = vpow.pop %v1184
        %v1186 = vmul.f32 %v1116, 1.442695
        %v1187 = vpow.pop %v1186
        %v1188 = vmul.f32 %v1117, 1.442695
        %v1189 = vpow.pop %v1188
        %v1190 = vmul.f32 %v1118, 1.442695
        %v1191 = vpow.pop %v1190
        %v1192 = vmul.f32 %v1119, 1.442695
        %v1193 = vpow.pop %v1192
        %v1194 = vmul.f32 %v1120, 1.442695
        %v1195 = vpow.pop %v1194
        %v1196 = vmul.f32 %v1121, 1.442695
        %v1197 = vpow.pop %v1196
        %v1198 = vmul.f32 %v1122, 1.442695
        %v1199 = vpow.pop %v1198
        %v1200 = vmul.f32 %v1123, 1.442695
        %v1201 = vpow.pop %v1200
        %v1202 = vmul.f32 %v1124, 1.442695
        %v1203 = vpow.pop %v1202
        %v1204 = vmul.f32 %v1125, 1.442695
        %v1205 = vpow.pop %v1204
        %v1206 = vmul.f32 %v1126, 1.442695
        %v1207 = vpow.pop %v1206
        %v1208 = vmul.f32 %v1127, 1.442695
        %v1209 = vpow.pop %v1208
        %v1210 = vmul.f32 %v1128, 1.442695
        %v1211 = vpow.pop %v1210
        %v1212 = vmul.f32 %v1129, 1.442695
        %v1213 = vpow.pop %v1212
        %v1214 = vmul.f32 %v1130, 1.442695
        %v1215 = vpow.pop %v1214
        %v1216 = vmul.f32 %v1131, 1.442695
        %v1217 = vpow.pop %v1216
        %v1218 = vmul.f32 %v1132, 1.442695
        %v1219 = vpow.pop %v1218
        %v1220 = vmul.f32 %v1133, 1.442695
        %v1221 = vpow.pop %v1220
        %v1222 = vmul.f32 %v1134, 1.442695
        %v1223 = vpow.pop %v1222
        %v1224 = vmul.f32 %v1135, 1.442695
        %v1225 = vpow.pop %v1224
        %v1226 = vmul.f32 %v1136, 1.442695
        %v1227 = vpow.pop %v1226
        %v1228 = vmul.f32 %v1137, 1.442695
        %v1229 = vpow.pop %v1228
        %v1230 = vmul.f32 %v1138, 1.442695
        %v1231 = vpow.pop %v1230
        %v1232 = vmul.f32 %v1139, 1.442695
        %v1233 = vpow.pop %v1232
        %v1234 = vmul.f32 %v1140, 1.442695
        %v1235 = vpow.pop %v1234
        %v1236 = vmul.f32 %v1141, 1.442695
        %v1237 = vpow.pop %v1236
        %v1238 = vmul.f32 %v1142, 1.442695
        %v1239 = vpow.pop %v1238
        %v1240 = vmul.f32 %v1143, 1.442695
        %v1241 = vpow.pop %v1240
        %v1242 = vmul.f32 %v1144, 1.442695
        %v1243 = vpow.pop %v1242
        %v1244 = vmul.f32 %v1145, 1.442695
        %v1245 = vpow.pop %v1244
        %v1246 = vmul.f32 %v1146, 1.442695
        %v1247 = vpow.pop %v1246
        %v1248 = vmul.f32 %v1147, 1.442695
        %v1249 = vpow.pop %v1248
        %v1250 = vmul.f32 %v1148, 1.442695
        %v1251 = vpow.pop %v1250
        %v1252 = vmul.f32 %v1149, 1.442695
        %v1253 = vpow.pop %v1252
        %v1254 = vmul.f32 %v1150, 1.442695
        %v1255 = vpow.pop %v1254
        %v1256 = vmul.f32 %v1151, 1.442695
        %v1257 = vpow.pop %v1256
        %v1258 = vmul.f32 %v1152, 1.442695
        %v1259 = vpow.pop %v1258
        %v1260 = vmul.f32 %v1153, 1.442695
        %v1261 = vpow.pop %v1260
        %v1262 = vmul.f32 %v1154, 1.442695
        %v1263 = vpow.pop %v1262
        %v1264 = vmul.f32 %v1155, 1.442695
        %v1265 = vpow.pop %v1264
        %v1266 = vmul.f32 %v1156, 1.442695
        %v1267 = vpow.pop %v1266
        %v1268 = vmul.f32 %v1157, 1.442695
        %v1269 = vpow.pop %v1268
        %v1270 = vmul.f32 %v1158, 1.442695
        %v1271 = vpow.pop %v1270
        %v1272 = vmul.f32 %v1159, 1.442695
        %v1273 = vpow.pop %v1272
        %v1274 = vmul.f32 %v1160, 1.442695
        %v1275 = vpow.pop %v1274
        %v1276 = vmul.f32 %v1161, 1.442695
        %v1277 = vpow.pop %v1276
        %v1278 = vmul.f32 %v1162, 1.442695
        %v1279 = vpow.pop %v1278
        %v1280 = vmul.f32 %v1163, 1.442695
        %v1281 = vpow.pop %v1280
        %v1282 = vmul.f32 %v1164, 1.442695
        %v1283 = vpow.pop %v1282
        %v1284 = vmul.f32 %v1165, 1.442695
        %v1285 = vpow.pop %v1284
        %v1286 = vmul.f32 %v1166, 1.442695
        %v1287 = vpow.pop %v1286
        %v1288 = vmul.f32 %v1167, 1.442695
        %v1289 = vpow.pop %v1288
        %v1290 = vmul.f32 %v1168, 1.442695
        %v1291 = vpow.pop %v1290
        %v1292 = vmul.f32 %v1169, 1.442695
        %v1293 = vpow.pop %v1292
        %v1294 = vmul.f32 %v1170, 1.442695
        %v1295 = vpow.pop %v1294
        %v1296 = vmul.f32 %v1171, 1.442695
        %v1297 = vpow.pop %v1296
        %v1298 = vmul.f32 %v1172, 1.442695
        %v1299 = vpow.pop %v1298
        %v1300 = vmul.f32 %v1173, 1.442695
        %v1301 = vpow.pop %v1300
        %v1302 = vadd.f32 %v1175, 1.0
        %v1303 = vadd.f32 %v1177, 1.0
        %v1304 = vadd.f32 %v1179, 1.0
        %v1305 = vadd.f32 %v1181, 1.0
        %v1306 = vadd.f32 %v1183, 1.0
        %v1307 = vadd.f32 %v1185, 1.0
        %v1308 = vadd.f32 %v1187, 1.0
        %v1309 = vadd.f32 %v1189, 1.0
        %v1310 = vadd.f32 %v1191, 1.0
        %v1311 = vadd.f32 %v1193, 1.0
        %v1312 = vadd.f32 %v1195, 1.0
        %v1313 = vadd.f32 %v1197, 1.0
        %v1314 = vadd.f32 %v1199, 1.0
        %v1315 = vadd.f32 %v1201, 1.0
        %v1316 = vadd.f32 %v1203, 1.0
        %v1317 = vadd.f32 %v1205, 1.0
        %v1318 = vadd.f32 %v1207, 1.0
        %v1319 = vadd.f32 %v1209, 1.0
        %v1320 = vadd.f32 %v1211, 1.0
        %v1321 = vadd.f32 %v1213, 1.0
        %v1322 = vadd.f32 %v1215, 1.0
        %v1323 = vadd.f32 %v1217, 1.0
        %v1324 = vadd.f32 %v1219, 1.0
        %v1325 = vadd.f32 %v1221, 1.0
        %v1326 = vadd.f32 %v1223, 1.0
        %v1327 = vadd.f32 %v1225, 1.0
        %v1328 = vadd.f32 %v1227, 1.0
        %v1329 = vadd.f32 %v1229, 1.0
        %v1330 = vadd.f32 %v1231, 1.0
        %v1331 = vadd.f32 %v1233, 1.0
        %v1332 = vadd.f32 %v1235, 1.0
        %v1333 = vadd.f32 %v1237, 1.0
        %v1334 = vadd.f32 %v1239, 1.0
        %v1335 = vadd.f32 %v1241, 1.0
        %v1336 = vadd.f32 %v1243, 1.0
        %v1337 = vadd.f32 %v1245, 1.0
        %v1338 = vadd.f32 %v1247, 1.0
        %v1339 = vadd.f32 %v1249, 1.0
        %v1340 = vadd.f32 %v1251, 1.0
        %v1341 = vadd.f32 %v1253, 1.0
        %v1342 = vadd.f32 %v1255, 1.0
        %v1343 = vadd.f32 %v1257, 1.0
        %v1344 = vadd.f32 %v1259, 1.0
        %v1345 = vadd.f32 %v1261, 1.0
        %v1346 = vadd.f32 %v1263, 1.0
        %v1347 = vadd.f32 %v1265, 1.0
        %v1348 = vadd.f32 %v1267, 1.0
        %v1349 = vadd.f32 %v1269, 1.0
        %v1350 = vadd.f32 %v1271, 1.0
        %v1351 = vadd.f32 %v1273, 1.0
        %v1352 = vadd.f32 %v1275, 1.0
        %v1353 = vadd.f32 %v1277, 1.0
        %v1354 = vadd.f32 %v1279, 1.0
        %v1355 = vadd.f32 %v1281, 1.0
        %v1356 = vadd.f32 %v1283, 1.0
        %v1357 = vadd.f32 %v1285, 1.0
        %v1358 = vadd.f32 %v1287, 1.0
        %v1359 = vadd.f32 %v1289, 1.0
        %v1360 = vadd.f32 %v1291, 1.0
        %v1361 = vadd.f32 %v1293, 1.0
        %v1362 = vadd.f32 %v1295, 1.0
        %v1363 = vadd.f32 %v1297, 1.0
        %v1364 = vadd.f32 %v1299, 1.0
        %v1365 = vadd.f32 %v1301, 1.0
        %v1366 = vrcp.pop %v1302
        %v1367 = vmul.f32 1.0, %v1366
        %v1368 = vrcp.pop %v1303
        %v1369 = vmul.f32 1.0, %v1368
        %v1370 = vrcp.pop %v1304
        %v1371 = vmul.f32 1.0, %v1370
        %v1372 = vrcp.pop %v1305
        %v1373 = vmul.f32 1.0, %v1372
        %v1374 = vrcp.pop %v1306
        %v1375 = vmul.f32 1.0, %v1374
        %v1376 = vrcp.pop %v1307
        %v1377 = vmul.f32 1.0, %v1376
        %v1378 = vrcp.pop %v1308
        %v1379 = vmul.f32 1.0, %v1378
        %v1380 = vrcp.pop %v1309
        %v1381 = vmul.f32 1.0, %v1380
        %v1382 = vrcp.pop %v1310
        %v1383 = vmul.f32 1.0, %v1382
        %v1384 = vrcp.pop %v1311
        %v1385 = vmul.f32 1.0, %v1384
        %v1386 = vrcp.pop %v1312
        %v1387 = vmul.f32 1.0, %v1386
        %v1388 = vrcp.pop %v1313
        %v1389 = vmul.f32 1.0, %v1388
        %v1390 = vrcp.pop %v1314
        %v1391 = vmul.f32 1.0, %v1390
        %v1392 = vrcp.pop %v1315
        %v1393 = vmul.f32 1.0, %v1392
        %v1394 = vrcp.pop %v1316
        %v1395 = vmul.f32 1.0, %v1394
        %v1396 = vrcp.pop %v1317
        %v1397 = vmul.f32 1.0, %v1396
        %v1398 = vrcp.pop %v1318
        %v1399 = vmul.f32 1.0, %v1398
        %v1400 = vrcp.pop %v1319
        %v1401 = vmul.f32 1.0, %v1400
        %v1402 = vrcp.pop %v1320
        %v1403 = vmul.f32 1.0, %v1402
        %v1404 = vrcp.pop %v1321
        %v1405 = vmul.f32 1.0, %v1404
        %v1406 = vrcp.pop %v1322
        %v1407 = vmul.f32 1.0, %v1406
        %v1408 = vrcp.pop %v1323
        %v1409 = vmul.f32 1.0, %v1408
        %v1410 = vrcp.pop %v1324
        %v1411 = vmul.f32 1.0, %v1410
        %v1412 = vrcp.pop %v1325
        %v1413 = vmul.f32 1.0, %v1412
        %v1414 = vrcp.pop %v1326
        %v1415 = vmul.f32 1.0, %v1414
        %v1416 = vrcp.pop %v1327
        %v1417 = vmul.f32 1.0, %v1416
        %v1418 = vrcp.pop %v1328
        %v1419 = vmul.f32 1.0, %v1418
        %v1420 = vrcp.pop %v1329
        %v1421 = vmul.f32 1.0, %v1420
        %v1422 = vrcp.pop %v1330
        %v1423 = vmul.f32 1.0, %v1422
        %v1424 = vrcp.pop %v1331
        %v1425 = vmul.f32 1.0, %v1424
        %v1426 = vrcp.pop %v1332
        %v1427 = vmul.f32 1.0, %v1426
        %v1428 = vrcp.pop %v1333
        %v1429 = vmul.f32 1.0, %v1428
        %v1430 = vrcp.pop %v1334
        %v1431 = vmul.f32 1.0, %v1430
        %v1432 = vrcp.pop %v1335
        %v1433 = vmul.f32 1.0, %v1432
        %v1434 = vrcp.pop %v1336
        %v1435 = vmul.f32 1.0, %v1434
        %v1436 = vrcp.pop %v1337
        %v1437 = vmul.f32 1.0, %v1436
        %v1438 = vrcp.pop %v1338
        %v1439 = vmul.f32 1.0, %v1438
        %v1440 = vrcp.pop %v1339
        %v1441 = vmul.f32 1.0, %v1440
        %v1442 = vrcp.pop %v1340
        %v1443 = vmul.f32 1.0, %v1442
        %v1444 = vrcp.pop %v1341
        %v1445 = vmul.f32 1.0, %v1444
        %v1446 = vrcp.pop %v1342
        %v1447 = vmul.f32 1.0, %v1446
        %v1448 = vrcp.pop %v1343
        %v1449 = vmul.f32 1.0, %v1448
        %v1450 = vrcp.pop %v1344
        %v1451 = vmul.f32 1.0, %v1450
        %v1452 = vrcp.pop %v1345
        %v1453 = vmul.f32 1.0, %v1452
        %v1454 = vrcp.pop %v1346
        %v1455 = vmul.f32 1.0, %v1454
        %v1456 = vrcp.pop %v1347
        %v1457 = vmul.f32 1.0, %v1456
        %v1458 = vrcp.pop %v1348
        %v1459 = vmul.f32 1.0, %v1458
        %v1460 = vrcp.pop %v1349
        %v1461 = vmul.f32 1.0, %v1460
        %v1462 = vrcp.pop %v1350
        %v1463 = vmul.f32 1.0, %v1462
        %v1464 = vrcp.pop %v1351
        %v1465 = vmul.f32 1.0, %v1464
        %v1466 = vrcp.pop %v1352
        %v1467 = vmul.f32 1.0, %v1466
        %v1468 = vrcp.pop %v1353
        %v1469 = vmul.f32 1.0, %v1468
        %v1470 = vrcp.pop %v1354
        %v1471 = vmul.f32 1.0, %v1470
        %v1472 = vrcp.pop %v1355
        %v1473 = vmul.f32 1.0, %v1472
        %v1474 = vrcp.pop %v1356
        %v1475 = vmul.f32 1.0, %v1474
        %v1476 = vrcp.pop %v1357
        %v1477 = vmul.f32 1.0, %v1476
        %v1478 = vrcp.pop %v1358
        %v1479 = vmul.f32 1.0, %v1478
        %v1480 = vrcp.pop %v1359
        %v1481 = vmul.f32 1.0, %v1480
        %v1482 = vrcp.pop %v1360
        %v1483 = vmul.f32 1.0, %v1482
        %v1484 = vrcp.pop %v1361
        %v1485 = vmul.f32 1.0, %v1484
        %v1486 = vrcp.pop %v1362
        %v1487 = vmul.f32 1.0, %v1486
        %v1488 = vrcp.pop %v1363
        %v1489 = vmul.f32 1.0, %v1488
        %v1490 = vrcp.pop %v1364
        %v1491 = vmul.f32 1.0, %v1490
        %v1492 = vrcp.pop %v1365
        %v1493 = vmul.f32 1.0, %v1492
        %v1494 = vmul.f32 %v952, %v1367
        %v1495 = vmul.f32 %v954, %v1369
        %v1496 = vmul.f32 %v956, %v1371
        %v1497 = vmul.f32 %v958, %v1373
        %v1498 = vmul.f32 %v962, %v1375
        %v1499 = vmul.f32 %v964, %v1377
        %v1500 = vmul.f32 %v966, %v1379
        %v1501 = vmul.f32 %v968, %v1381
        %v1502 = vmul.f32 %v972, %v1383
        %v1503 = vmul.f32 %v974, %v1385
        %v1504 = vmul.f32 %v976, %v1387
        %v1505 = vmul.f32 %v978, %v1389
        %v1506 = vmul.f32 %v982, %v1391
        %v1507 = vmul.f32 %v984, %v1393
        %v1508 = vmul.f32 %v986, %v1395
        %v1509 = vmul.f32 %v988, %v1397
        %v1510 = vmul.f32 %v992, %v1399
        %v1511 = vmul.f32 %v994, %v1401
        %v1512 = vmul.f32 %v996, %v1403
        %v1513 = vmul.f32 %v998, %v1405
        %v1514 = vmul.f32 %v1002, %v1407
        %v1515 = vmul.f32 %v1004, %v1409
        %v1516 = vmul.f32 %v1006, %v1411
        %v1517 = vmul.f32 %v1008, %v1413
        %v1518 = vmul.f32 %v1012, %v1415
        %v1519 = vmul.f32 %v1014, %v1417
        %v1520 = vmul.f32 %v1016, %v1419
        %v1521 = vmul.f32 %v1018, %v1421
        %v1522 = vmul.f32 %v1022, %v1423
        %v1523 = vmul.f32 %v1024, %v1425
        %v1524 = vmul.f32 %v1026, %v1427
        %v1525 = vmul.f32 %v1028, %v1429
        %v1526 = vmul.f32 %v1032, %v1431
        %v1527 = vmul.f32 %v1034, %v1433
        %v1528 = vmul.f32 %v1036, %v1435
        %v1529 = vmul.f32 %v1038, %v1437
        %v1530 = vmul.f32 %v1042, %v1439
        %v1531 = vmul.f32 %v1044, %v1441
        %v1532 = vmul.f32 %v1046, %v1443
        %v1533 = vmul.f32 %v1048, %v1445
        %v1534 = vmul.f32 %v1052, %v1447
        %v1535 = vmul.f32 %v1054, %v1449
        %v1536 = vmul.f32 %v1056, %v1451
        %v1537 = vmul.f32 %v1058, %v1453
        %v1538 = vmul.f32 %v1062, %v1455
        %v1539 = vmul.f32 %v1064, %v1457
        %v1540 = vmul.f32 %v1066, %v1459
        %v1541 = vmul.f32 %v1068, %v1461
        %v1542 = vmul.f32 %v1072, %v1463
        %v1543 = vmul.f32 %v1074, %v1465
        %v1544 = vmul.f32 %v1076, %v1467
        %v1545 = vmul.f32 %v1078, %v1469
        %v1546 = vmul.f32 %v1082, %v1471
        %v1547 = vmul.f32 %v1084, %v1473
        %v1548 = vmul.f32 %v1086, %v1475
        %v1549 = vmul.f32 %v1088, %v1477
        %v1550 = vmul.f32 %v1092, %v1479
        %v1551 = vmul.f32 %v1094, %v1481
        %v1552 = vmul.f32 %v1096, %v1483
        %v1553 = vmul.f32 %v1098, %v1485
        %v1554 = vmul.f32 %v1102, %v1487
        %v1555 = vmul.f32 %v1104, %v1489
        %v1556 = vmul.f32 %v1106, %v1491
        %v1557 = vmul.f32 %v1108, %v1493
        %v1558 = vadd.f32 %v1494, %v1496
        %v1559 = vadd.f32 %v1558, %v1498
        %v1560 = vadd.f32 %v1559, %v1500
        %v1561 = vadd.f32 %v1560, %v1502
        %v1562 = vadd.f32 %v1561, %v1504
        %v1563 = vadd.f32 %v1562, %v1506
        %v1564 = vadd.f32 %v1563, %v1508
        %v1565 = vadd.f32 %v1564, %v1510
        %v1566 = vadd.f32 %v1565, %v1512
        %v1567 = vadd.f32 %v1566, %v1514
        %v1568 = vadd.f32 %v1567, %v1516
        %v1569 = vadd.f32 %v1568, %v1518
        %v1570 = vadd.f32 %v1569, %v1520
        %v1571 = vadd.f32 %v1570, %v1522
        %v1572 = vadd.f32 %v1571, %v1524
        %v1573 = vadd.f32 %v1572, %v1526
        %v1574 = vadd.f32 %v1573, %v1528
        %v1575 = vadd.f32 %v1574, %v1530
        %v1576 = vadd.f32 %v1575, %v1532
        %v1577 = vadd.f32 %v1576, %v1534
        %v1578 = vadd.f32 %v1577, %v1536
        %v1579 = vadd.f32 %v1578, %v1538
        %v1580 = vadd.f32 %v1579, %v1540
        %v1581 = vadd.f32 %v1580, %v1542
        %v1582 = vadd.f32 %v1581, %v1544
        %v1583 = vadd.f32 %v1582, %v1546
        %v1584 = vadd.f32 %v1583, %v1548
        %v1585 = vadd.f32 %v1584, %v1550
        %v1586 = vadd.f32 %v1585, %v1552
        %v1587 = vadd.f32 %v1586, %v1554
        %v1588 = vadd.f32 %v1587, %v1556
        %v1589 = vrot.slane %v1588, 4
        %v1590 = vadd.f32 %v1588, %v1589
        %v1591 = vrot.slane %v1590, 2
        %v1592 = vadd.f32 %v1590, %v1591
        %v1593 = vrot.slane %v1592, 1
        %v1594 = vadd.f32 %v1592, %v1593
        %v1595 = vadd.f32 %v1495, %v1497
        %v1596 = vadd.f32 %v1595, %v1499
        %v1597 = vadd.f32 %v1596, %v1501
        %v1598 = vadd.f32 %v1597, %v1503
        %v1599 = vadd.f32 %v1598, %v1505
        %v1600 = vadd.f32 %v1599, %v1507
        %v1601 = vadd.f32 %v1600, %v1509
        %v1602 = vadd.f32 %v1601, %v1511
        %v1603 = vadd.f32 %v1602, %v1513
        %v1604 = vadd.f32 %v1603, %v1515
        %v1605 = vadd.f32 %v1604, %v1517
        %v1606 = vadd.f32 %v1605, %v1519
        %v1607 = vadd.f32 %v1606, %v1521
        %v1608 = vadd.f32 %v1607, %v1523
        %v1609 = vadd.f32 %v1608, %v1525
        %v1610 = vadd.f32 %v1609, %v1527
        %v1611 = vadd.f32 %v1610, %v1529
        %v1612 = vadd.f32 %v1611, %v1531
        %v1613 = vadd.f32 %v1612, %v1533
        %v1614 = vadd.f32 %v1613, %v1535
        %v1615 = vadd.f32 %v1614, %v1537
        %v1616 = vadd.f32 %v1615, %v1539
        %v1617 = vadd.f32 %v1616, %v1541
        %v1618 = vadd.f32 %v1617, %v1543
        %v1619 = vadd.f32 %v1618, %v1545
        %v1620 = vadd.f32 %v1619, %v1547
        %v1621 = vadd.f32 %v1620, %v1549
        %v1622 = vadd.f32 %v1621, %v1551
        %v1623 = vadd.f32 %v1622, %v1553
        %v1624 = vadd.f32 %v1623, %v1555
        %v1625 = vadd.f32 %v1624, %v1557
        %v1626 = vrot.slane %v1625, 4
        %v1627 = vadd.f32 %v1625, %v1626
        %v1628 = vrot.slane %v1627, 2
        %v1629 = vadd.f32 %v1627, %v1628
        %v1630 = vrot.slane %v1629, 1
        %v1631 = vadd.f32 %v1629, %v1630
        %s1632 = sshra.s32 %s21, 3
        %s1633 = sand.u32 %s21, 7
        %s1634 = sshra.s32 %s21, 3
        %s1635 = sand.u32 %s21, 7
        %s1636 = smul.u32 %s1632, 2
        %s1637 = smul.u32 %s1636, 8
        %s1638 = sadd.s32 %s1637, %s1635
        %s1639 = scalar_lea.vmem [#allocation2], %s1638
        %v1640 = vld [vmem:[%s1639] ss:$8 sm:$0x3]
        %v1643 = vcombine.low %v1594, %v1631
        %v1645 = vunpack.c.l.s4 1966171168
        %v1646 = vunpack.c.0.s8 %v1645
        %v1647 = vlaneseq
        %v1648 = vshrl.u32 %v1647, 7
        %v1649 = vsub.s32 %v1646, %v1648
        %v1650 = vrot.slane %v1643, %v1649
        %v1652 = vunpack.c.l.s4 1966171168
        %v1653 = vunpack.c.0.s8 %v1652
        %v1654 = vlaneseq
        %v1655 = vshrl.u32 %v1654, 7
        %v1656 = vsub.s32 %v1653, %v1655
        %v1657 = vrot.slane %v1650, %v1656
        %v1659 = vadd.f32 %v1640, %v1657
        %v1660 = vlaneseq
        %vm1661 = vcmp.ge.s32.totalorder %v1660, 0
        %vm1662 = vcmp.lt.s32.totalorder %v1660, 256
        %vm1663 = vmand %vm1661, %vm1662
        %1664 = vst.msk [vmem:[%s1639] ss:$8 sm:$0x3] %vm1663, %v1659
        %1665 = vst.msk [vmem:[%s1639] ss:$8 sm:$0x0] %vm1663, %v1659
        %p1666 = scmp.eq.s32.totalorder %s21, 1
        %p1667 = pnand %p1666, %p241
        %p1668 = pneg %p1667
        // Predicated region
        $region45: #{tpu_custom_call.1} parent=39 // pred_check
          _
        $region46: #{tpu_custom_call.1} parent=39 // pred_check_branch
          %1670 = sbr.rel (%p1667) target = $region48
        $region47: #{tpu_custom_call.1} parent=39 // pred_region
          %v1671 = vld [vmem:[#allocation2] sm:$0xff]
          %v1672 = vld [vmem:[#allocation2 + $0x8] sm:$0xff]
          %v1673 = vmul.f32 %v1671, 0.00390625
          %v1674 = vmul.f32 %v1672, 0.00390625
          %1675 = vst [vmem:[#allocation2] sm:$0xff] %v1673
          %1676 = vst [vmem:[#allocation2 + $0x8] sm:$0xff] %v1674
        $region48: #{tpu_custom_call.1} parent=39 // pred_fallthru
          _
        // Predicated region
        $region49: #{tpu_custom_call.1} parent=39 // pred_check
          %p1677 = pneg %p154
        $region50: #{tpu_custom_call.1} parent=39 // pred_check_branch
          %1679 = sbr.rel (%p1677) target = $region52
        $region51: #{tpu_custom_call.1} parent=39 // pred_region
          %s1681 = ssub.s32 256, 256
          %1682 = vsyncadd [#allocation3], %s1681
          %s1684 = sshll.u32 [#allocation2], 4
          %s1685 = int_to_ptr.vmem [resolvable:$true] %s1684
          %1687 = dma.vmem_to_hbm [thread:$0]  %s1685, 256, %s5, [#allocation3]
        $region52: #{tpu_custom_call.1} parent=39 // pred_fallthru
          _
        // Predicated region
        $region53: #{tpu_custom_call.1} parent=39 // pred_check
          %p1688 = pneg %p154
        $region54: #{tpu_custom_call.1} parent=39 // pred_check_branch
          %1690 = sbr.rel (%p1688) target = $region56
        $region55: #{tpu_custom_call.1} parent=39 // pred_region
          %1691 = dma.done [#allocation3], 256
        $region56: #{tpu_custom_call.1} parent=39 // pred_fallthru
          _
      $region40: #{tpu_custom_call.1} parent=5 // pred_fallthru
        _
      %p1692 = scmp.le.s32.totalorder 2, %s12
      // Predicated region
      $region57: #{tpu_custom_call.1} parent=5 // pred_check
        %p1693 = pneg %p1692
      $region58: #{tpu_custom_call.1} parent=5 // pred_check_branch
        %1695 = sbr.rel (%p1693) target = $region60
      $region59: #{tpu_custom_call.1} parent=5 // pred_region
        %s1696 = ssub.s32 %s12, 2
      $region60: #{tpu_custom_call.1} parent=5 // pred_fallthru
        _
    $region6: #{tpu_custom_call.1} parent=1 // loop_footer
      %s16 = sadd.s32 1, %s12
    $region7: #{tpu_custom_call.1} parent=1 // loop_footer_branch
      %11 = sbr.rel target = $region3
    $region8: #{tpu_custom_call.1} parent=1 // loop_exit
      _
    %1697 = vsyncpa [#allocation3], 1
    %s1698 = scalar_lea.sflag [#allocation3], 1
    %1699 = vsyncpa %s1698, 1

</llo_original>
